<compile_context>
chip_gen: v5e
topology: v5e:2x2
jax: 0.10.0
libtpu: 0.0.40
codegen_flags: <defaults>
</compile_context>

<pallas_src>
import functools

import jax
import jax.numpy as jnp
from jax import lax
from jax.experimental import pallas as pl
from jax.experimental.pallas import tpu as pltpu

# ---------------- module hyper-parameters (match nn.Module defaults) --------
DIM = 4                      # input / output channels
HEADS = 4
DIM_HEAD = 32
HIDDEN = HEADS * DIM_HEAD    # 128
SCALE = DIM_HEAD ** (-0.5)

QT = 128                     # query tile width (one grid step along axis 1)
VP_STRIDE = 8                # rows/head in folded-v' scratch: DIM proj + 1 ones + pad


# ---------------- kernel -----------------------------------------------------
def _attention_kernel(xf_ref, xt_ref, wq_ref, wk_ref, wvp_ref, b_ref,
                      o_ref, k_scr, vp_scr, *, n_real, n_pad):
    """grid = (B, n_pad // QT): one batch element x one query tile per step.

    xf_ref  : (1, DIM, n_pad)          full flattened input (read at qi==0 only)
    xt_ref  : (1, DIM, QT)             this query tile's input columns
    wq_ref  : (DIM, HIDDEN)            q projection (scale pre-folded), lane-dense
    wk_ref  : (DIM, HIDDEN)            k projection, lane-dense
    wvp_ref : (DIM, HEADS*VP_STRIDE)   folded (out-proj @ v-proj), lane-dense, zero-padded rows
    b_ref   : (DIM, 1)                 out bias column
    o_ref   : (1, DIM, QT)
    k_scr   : (HEADS, DIM_HEAD, n_pad)  bf16   per-batch keys
    vp_scr  : (HEADS, VP_STRIDE, n_pad) bf16   per-batch folded v' (+ masked ones row)
    """
    qi = pl.program_id(1)

    # ---- per-batch prep: runs once per batch element; scratch persists ----
    @pl.when(qi == 0)
    def _init():
        x_f = xf_ref[0]                                            # (DIM, n_pad) f32
        # k for all heads in one matmul: contract channel dim -> (HIDDEN, n_pad)
        k_all = lax.dot_general(wk_ref[...], x_f, (((0,), (0,)), ((), ())),
                                preferred_element_type=jnp.float32)
        # folded v' for all heads in one matmul -> (HEADS*VP_STRIDE, n_pad)
        vp_all = lax.dot_general(wvp_ref[...], x_f, (((0,), (0,)), ((), ())),
                                 preferred_element_type=jnp.float32)
        # ones row (zero at padded key columns): its MXU row-sum is the softmax denom
        ones_row = (lax.broadcasted_iota(jnp.int32, (1, n_pad), 1)
                    < n_real).astype(jnp.bfloat16)
        for h in range(HEADS):
            k_scr[h] = k_all[h * DIM_HEAD:(h + 1) * DIM_HEAD].astype(jnp.bfloat16)
            vp_scr[h] = vp_all[h * VP_STRIDE:(h + 1) * VP_STRIDE].astype(jnp.bfloat16)
            vp_scr[h, DIM:DIM + 1, :] = ones_row

    # ---- per-tile attention ----
    x_t = xt_ref[0]                                                # (DIM, QT) f32
    qt = x_t.shape[-1]
    # q rows for this tile only (scale already folded into wq)
    q_all = lax.dot_general(wq_ref[...], x_t, (((0,), (0,)), ((), ())),
                            preferred_element_type=jnp.float32
                            ).astype(jnp.bfloat16)                 # (HIDDEN, QT)

    acc = jnp.zeros((DIM, qt), jnp.float32)
    for h in range(HEADS):
        qh = q_all[h * DIM_HEAD:(h + 1) * DIM_HEAD]                # (dh, qt) bf16
        kh = k_scr[h]                                              # (dh, N)  bf16
        # s[x, y] = sum_c q[c, x] * k[c, y]    (no transposes)
        s = lax.dot_general(qh, kh, (((0,), (0,)), ((), ())),
                            preferred_element_type=jnp.float32)    # (qt, N) f32
        m = jnp.max(s, axis=-1, keepdims=True)                     # (qt, 1)
        # TODO(synk): on v5e (no bf16 EUP) this exp is internally widened to f32.
        p = jnp.exp((s - m).astype(jnp.bfloat16))                  # (qt, N) bf16
        # one PV matmul: rows 0..DIM-1 = w_out_h @ (v_h p^T), row DIM = rowsum(p)
        res = lax.dot_general(vp_scr[h], p, (((1,), (1,)), ((), ())),
                              preferred_element_type=jnp.float32)  # (VP_STRIDE, qt)
        acc = acc + res[:DIM] * pl.reciprocal(res[DIM:DIM + 1], approx=True)

    o_ref[0] = (acc + b_ref[...]).astype(o_ref.dtype)


# ---------------- wrapper -----------------------------------------------------
@jax.jit
def attention_forward(x_nchw, w_qkv, w_out, b_out):
    """x_nchw: (B, DIM, H, W) f32; w_qkv: (3*HIDDEN, DIM); w_out: (DIM, HIDDEN);
    b_out: (DIM,) -> (B, DIM, H, W) f32."""
    B, C, H, W = x_nchw.shape
    N = H * W
    n_pad = max(QT, ((N + QT - 1) // QT) * QT)
    nq = n_pad // QT

    # NCHW -> (B, C, N): free reshape; pad spatial dim to a multiple of 128.
    x_flat = x_nchw.reshape(B, C, N)
    if n_pad != N:
        x_flat = jnp.pad(x_flat, ((0, 0), (0, 0), (0, n_pad - N)))

    # --- tiny one-off weight prep (lane-dense, scale + out-proj folded) ---
    w_q = w_qkv[:HIDDEN]                       # (HIDDEN, DIM)
    w_k = w_qkv[HIDDEN:2 * HIDDEN]
    w_v = w_qkv[2 * HIDDEN:]
    wq_t = (w_q * SCALE).T                     # (DIM, HIDDEN)
    wk_t = w_k.T                               # (DIM, HIDDEN)
    # per-head fold: W'_h[d, e] = sum_c w_out[d, h*dh+c] * w_v[h*dh+c, e]
    wph = jnp.einsum('dhc,hce->hde',
                     w_out.reshape(DIM, HEADS, DIM_HEAD),
                     w_v.reshape(HEADS, DIM_HEAD, DIM))        # (HEADS, DIM, DIM)
    wvp_t = jnp.transpose(wph, (2, 0, 1))                      # (DIM_in, HEADS, DIM_out)
    wvp_t = jnp.pad(wvp_t, ((0, 0), (0, 0), (0, VP_STRIDE - DIM)))
    wvp_t = wvp_t.reshape(DIM, HEADS * VP_STRIDE)              # (DIM, 32)
    b_col = b_out.reshape(C, 1)

    kernel = functools.partial(_attention_kernel, n_real=N, n_pad=n_pad)

    out_flat = pl.pallas_call(
        kernel,
        out_shape=jax.ShapeDtypeStruct((B, C, n_pad), jnp.float32),
        grid_spec=pltpu.PrefetchScalarGridSpec(
            num_scalar_prefetch=0,
            grid=(B, nq),
            in_specs=[
                pl.BlockSpec((1, C, n_pad), lambda b, q: (b, 0, 0)),   # full x (k/v' prep)
                pl.BlockSpec((1, C, QT), lambda b, q: (b, 0, q)),      # x tile (q rows)
                pl.BlockSpec((C, HIDDEN), lambda b, q: (0, 0)),        # wq (pre-scaled)
                pl.BlockSpec((C, HIDDEN), lambda b, q: (0, 0)),        # wk
                pl.BlockSpec((C, HEADS * VP_STRIDE), lambda b, q: (0, 0)),  # folded v'/out
                pl.BlockSpec((C, 1), lambda b, q: (0, 0)),             # out bias column
            ],
            out_specs=pl.BlockSpec((1, C, QT), lambda b, q: (b, 0, q)),
            scratch_shapes=[
                pltpu.VMEM((HEADS, DIM_HEAD, n_pad), jnp.bfloat16),    # k
                pltpu.VMEM((HEADS, VP_STRIDE, n_pad), jnp.bfloat16),   # folded v' + ones
            ],
        ),
        compiler_params=pltpu.CompilerParams(
            dimension_semantics=("parallel", "arbitrary"),
            vmem_limit_bytes=32 * 1024 * 1024,
        ),
    )(x_flat, x_flat, wq_t, wk_t, wvp_t, b_col)

    # drop spatial padding, (B, C, N) -> NCHW (free reshape).
    return out_flat[:, :, :N].reshape(B, C, H, W)


# ---------------- pure-JAX reference (for a sanity check) --------------------
def attention_reference(x_nchw, w_qkv, w_out, b_out):
    B, C, H, W = x_nchw.shape
    N = H * W
    x = x_nchw.reshape(B, C, N)                                        # (B, C, N)
    qkv = jnp.einsum('oc,bcn->bon', w_qkv, x)                          # (B, 3*HID, N)
    qkv = qkv.reshape(B, 3, HEADS, DIM_HEAD, N)
    q, k, v = qkv[:, 0], qkv[:, 1], qkv[:, 2]                          # (B, H, dh, N)
    s = jnp.einsum('bhcx,bhcy->bhxy', q * SCALE, k)
    p = jax.nn.softmax(s, axis=-1)
    o = jnp.einsum('bhxy,bhcy->bhcx', p, v).reshape(B, HIDDEN, N)
    o = jnp.einsum('dc,bcn->bdn', w_out, o) + b_out[None, :, None]
    return o.reshape(B, C, H, W)


# ---------------- main --------------------------------------------------------
if __name__ == "__main__":
    key = jax.random.PRNGKey(0)
    kx, kq, kw, kb = jax.random.split(key, 4)

    B, H, W = 2, 16, 16
    x = jax.random.normal(kx, (B, DIM, H, W), dtype=jnp.float32)

    # Parameters in the Conv2d's natural matrix layout:
    # to_qkv: Conv2d(dim, 3*hidden, 1, bias=False) -> weight (3*hidden, dim)
    w_qkv = jax.random.normal(kq, (3 * HIDDEN, DIM), dtype=jnp.float32) * 0.05
    # to_out: Conv2d(hidden, dim, 1) -> weight (dim, hidden), bias (dim,)
    w_out = jax.random.normal(kw, (DIM, HIDDEN), dtype=jnp.float32) * 0.05
    b_out = jax.random.normal(kb, (DIM,), dtype=jnp.float32) * 0.05

    out = attention_forward(x, w_qkv, w_out, b_out)
    out = jax.block_until_ready(out)

    ref = attention_reference(x, w_qkv, w_out, b_out)
    assert out.shape == (B, DIM, H, W)
    # bf16 MXU/exp inputs + approximate reciprocal -> loosened tolerance vs f32 ref.
    assert jnp.allclose(out, ref, atol=2e-2, rtol=2e-2), "mismatch vs reference"

    print("KERNEL_OK")
</pallas_src>

<mosaic_0001>
module attributes {stable_mosaic.version = 11 : i64} {
  func.func @_attention_kernel(%arg0: i32, %arg1: i32, %arg2: memref<1x4x256xf32, #tpu.memory_space<vmem>>, %arg3: memref<1x4x128xf32, #tpu.memory_space<vmem>>, %arg4: memref<4x128xf32, #tpu.memory_space<vmem>>, %arg5: memref<4x128xf32, #tpu.memory_space<vmem>>, %arg6: memref<4x32xf32, #tpu.memory_space<vmem>>, %arg7: memref<4x1xf32, #tpu.memory_space<vmem>>, %arg8: memref<1x4x128xf32, #tpu.memory_space<vmem>>, %arg9: memref<4x32x256xbf16, #tpu.memory_space<vmem>>, %arg10: memref<4x8x256xbf16, #tpu.memory_space<vmem>>) attributes {dimension_semantics = [#tpu.dimension_semantics<parallel>, #tpu.dimension_semantics<arbitrary>], iteration_bounds = array<i64: 2, 2>, scalar_prefetch = 0 : i64, scratch_operands = 2 : i64, tpu.core_type = #tpu.core_type<tc>, window_params = [{transform_indices = @transform_0, window_bounds = array<i64: 1, 4, 256>}, {transform_indices = @transform_1, window_bounds = array<i64: 1, 4, 128>}, {pipeline_mode = #tpu.pipeline_mode<synchronous>, transform_indices = @transform_2, window_bounds = array<i64: 4, 128>}, {pipeline_mode = #tpu.pipeline_mode<synchronous>, transform_indices = @transform_3, window_bounds = array<i64: 4, 128>}, {pipeline_mode = #tpu.pipeline_mode<synchronous>, transform_indices = @transform_4, window_bounds = array<i64: 4, 32>}, {pipeline_mode = #tpu.pipeline_mode<synchronous>, transform_indices = @transform_5, window_bounds = array<i64: 4, 1>}, {transform_indices = @transform_6, window_bounds = array<i64: 1, 4, 128>}]} {
    %c0_i32 = arith.constant 0 : i32
    %0 = arith.cmpi eq, %arg1, %c0_i32 : i32
    %1 = arith.extui %0 : i1 to i32
    %c0_i32_0 = arith.constant 0 : i32
    %2 = arith.cmpi ne, %1, %c0_i32_0 : i32
    scf.if %2 {
      %c0_44 = arith.constant 0 : index
      %c0_45 = arith.constant 0 : index
      %c0_46 = arith.constant 0 : index
      %91 = vector.load %arg2[%c0_44, %c0_45, %c0_46] : memref<1x4x256xf32, #tpu.memory_space<vmem>>, vector<1x4x256xf32>
      %92 = vector.shape_cast %91 : vector<1x4x256xf32> to vector<4x256xf32>
      %c0_47 = arith.constant 0 : index
      %c0_48 = arith.constant 0 : index
      %93 = vector.load %arg5[%c0_47, %c0_48] : memref<4x128xf32, #tpu.memory_space<vmem>>, vector<4x128xf32>
      %cst_49 = arith.constant dense<0.000000e+00> : vector<128x256xf32>
      %94 = tpu.matmul %93, %92, %cst_49 {dimension_numbers = #tpu.dot_dimension_numbers<[0], [0], [1], [1], [0, 1, 1, 1], [], []>} : vector<4x128xf32>, vector<4x256xf32>, vector<128x256xf32> -> vector<128x256xf32>
      %c0_50 = arith.constant 0 : index
      %c0_51 = arith.constant 0 : index
      %95 = vector.load %arg6[%c0_50, %c0_51] : memref<4x32xf32, #tpu.memory_space<vmem>>, vector<4x32xf32>
      %cst_52 = arith.constant dense<0.000000e+00> : vector<32x256xf32>
      %96 = tpu.matmul %95, %92, %cst_52 {dimension_numbers = #tpu.dot_dimension_numbers<[0], [0], [1], [1], [0, 1, 1, 1], [], []>} : vector<4x32xf32>, vector<4x256xf32>, vector<32x256xf32> -> vector<32x256xf32>
      %97 = tpu.iota {dimensions = array<i32: 1>} : vector<1x256xi32>
      %c256_i32 = arith.constant 256 : i32
      %98 = vector.broadcast %c256_i32 : i32 to vector<1x256xi32>
      %99 = arith.cmpi slt, %97, %98 : vector<1x256xi32>
      %100 = arith.extui %99 : vector<1x256xi1> to vector<1x256xi32>
      %101 = arith.sitofp %100 : vector<1x256xi32> to vector<1x256xf32>
      %102 = arith.truncf %101 : vector<1x256xf32> to vector<1x256xbf16>
      %103 = vector.extract_strided_slice %94 {offsets = [0, 0], sizes = [32, 256], strides = [1, 1]} : vector<128x256xf32> to vector<32x256xf32>
      %104 = arith.truncf %103 : vector<32x256xf32> to vector<32x256xbf16>
      %c0_53 = arith.constant 0 : index
      %c0_54 = arith.constant 0 : index
      %c0_55 = arith.constant 0 : index
      %105 = vector.load %arg9[%c0_53, %c0_54, %c0_55] : memref<4x32x256xbf16, #tpu.memory_space<vmem>>, vector<1x32x256xbf16>
      %106 = vector.shape_cast %105 : vector<1x32x256xbf16> to vector<32x256xbf16>
      %107 = vector.shape_cast %104 : vector<32x256xbf16> to vector<1x32x256xbf16>
      tpu.vector_store %arg9[%c0_53, %c0_54, %c0_55], %107 {strides = array<i32>} : memref<4x32x256xbf16, #tpu.memory_space<vmem>>, vector<1x32x256xbf16>,
      %108 = vector.extract_strided_slice %96 {offsets = [0, 0], sizes = [8, 256], strides = [1, 1]} : vector<32x256xf32> to vector<8x256xf32>
      %109 = arith.truncf %108 : vector<8x256xf32> to vector<8x256xbf16>
      %c0_56 = arith.constant 0 : index
      %c0_57 = arith.constant 0 : index
      %c0_58 = arith.constant 0 : index
      %110 = vector.load %arg10[%c0_56, %c0_57, %c0_58] : memref<4x8x256xbf16, #tpu.memory_space<vmem>>, vector<1x8x256xbf16>
      %111 = vector.shape_cast %110 : vector<1x8x256xbf16> to vector<8x256xbf16>
      %112 = vector.shape_cast %109 : vector<8x256xbf16> to vector<1x8x256xbf16>
      tpu.vector_store %arg10[%c0_56, %c0_57, %c0_58], %112 {strides = array<i32>} : memref<4x8x256xbf16, #tpu.memory_space<vmem>>, vector<1x8x256xbf16>,
      %c0_59 = arith.constant 0 : index
      %c4 = arith.constant 4 : index
      %c0_60 = arith.constant 0 : index
      %113 = vector.load %arg10[%c0_59, %c4, %c0_60] : memref<4x8x256xbf16, #tpu.memory_space<vmem>>, vector<1x1x256xbf16>
      %114 = vector.shape_cast %113 : vector<1x1x256xbf16> to vector<1x256xbf16>
      %115 = vector.shape_cast %102 : vector<1x256xbf16> to vector<1x1x256xbf16>
      tpu.vector_store %arg10[%c0_59, %c4, %c0_60], %115 {strides = array<i32>} : memref<4x8x256xbf16, #tpu.memory_space<vmem>>, vector<1x1x256xbf16>,
      %116 = vector.extract_strided_slice %94 {offsets = [32, 0], sizes = [32, 256], strides = [1, 1]} : vector<128x256xf32> to vector<32x256xf32>
      %117 = arith.truncf %116 : vector<32x256xf32> to vector<32x256xbf16>
      %c1_61 = arith.constant 1 : index
      %c0_62 = arith.constant 0 : index
      %c0_63 = arith.constant 0 : index
      %118 = vector.load %arg9[%c1_61, %c0_62, %c0_63] : memref<4x32x256xbf16, #tpu.memory_space<vmem>>, vector<1x32x256xbf16>
      %119 = vector.shape_cast %118 : vector<1x32x256xbf16> to vector<32x256xbf16>
      %120 = vector.shape_cast %117 : vector<32x256xbf16> to vector<1x32x256xbf16>
      tpu.vector_store %arg9[%c1_61, %c0_62, %c0_63], %120 {strides = array<i32>} : memref<4x32x256xbf16, #tpu.memory_space<vmem>>, vector<1x32x256xbf16>,
      %121 = vector.extract_strided_slice %96 {offsets = [8, 0], sizes = [8, 256], strides = [1, 1]} : vector<32x256xf32> to vector<8x256xf32>
      %122 = arith.truncf %121 : vector<8x256xf32> to vector<8x256xbf16>
      %c1_64 = arith.constant 1 : index
      %c0_65 = arith.constant 0 : index
      %c0_66 = arith.constant 0 : index
      %123 = vector.load %arg10[%c1_64, %c0_65, %c0_66] : memref<4x8x256xbf16, #tpu.memory_space<vmem>>, vector<1x8x256xbf16>
      %124 = vector.shape_cast %123 : vector<1x8x256xbf16> to vector<8x256xbf16>
      %125 = vector.shape_cast %122 : vector<8x256xbf16> to vector<1x8x256xbf16>
      tpu.vector_store %arg10[%c1_64, %c0_65, %c0_66], %125 {strides = array<i32>} : memref<4x8x256xbf16, #tpu.memory_space<vmem>>, vector<1x8x256xbf16>,
      %c1_67 = arith.constant 1 : index
      %c4_68 = arith.constant 4 : index
      %c0_69 = arith.constant 0 : index
      %126 = vector.load %arg10[%c1_67, %c4_68, %c0_69] : memref<4x8x256xbf16, #tpu.memory_space<vmem>>, vector<1x1x256xbf16>
      %127 = vector.shape_cast %126 : vector<1x1x256xbf16> to vector<1x256xbf16>
      %128 = vector.shape_cast %102 : vector<1x256xbf16> to vector<1x1x256xbf16>
      tpu.vector_store %arg10[%c1_67, %c4_68, %c0_69], %128 {strides = array<i32>} : memref<4x8x256xbf16, #tpu.memory_space<vmem>>, vector<1x1x256xbf16>,
      %129 = vector.extract_strided_slice %94 {offsets = [64, 0], sizes = [32, 256], strides = [1, 1]} : vector<128x256xf32> to vector<32x256xf32>
      %130 = arith.truncf %129 : vector<32x256xf32> to vector<32x256xbf16>
      %c2_70 = arith.constant 2 : index
      %c0_71 = arith.constant 0 : index
      %c0_72 = arith.constant 0 : index
      %131 = vector.load %arg9[%c2_70, %c0_71, %c0_72] : memref<4x32x256xbf16, #tpu.memory_space<vmem>>, vector<1x32x256xbf16>
      %132 = vector.shape_cast %131 : vector<1x32x256xbf16> to vector<32x256xbf16>
      %133 = vector.shape_cast %130 : vector<32x256xbf16> to vector<1x32x256xbf16>
      tpu.vector_store %arg9[%c2_70, %c0_71, %c0_72], %133 {strides = array<i32>} : memref<4x32x256xbf16, #tpu.memory_space<vmem>>, vector<1x32x256xbf16>,
      %134 = vector.extract_strided_slice %96 {offsets = [16, 0], sizes = [8, 256], strides = [1, 1]} : vector<32x256xf32> to vector<8x256xf32>
      %135 = arith.truncf %134 : vector<8x256xf32> to vector<8x256xbf16>
      %c2_73 = arith.constant 2 : index
      %c0_74 = arith.constant 0 : index
      %c0_75 = arith.constant 0 : index
      %136 = vector.load %arg10[%c2_73, %c0_74, %c0_75] : memref<4x8x256xbf16, #tpu.memory_space<vmem>>, vector<1x8x256xbf16>
      %137 = vector.shape_cast %136 : vector<1x8x256xbf16> to vector<8x256xbf16>
      %138 = vector.shape_cast %135 : vector<8x256xbf16> to vector<1x8x256xbf16>
      tpu.vector_store %arg10[%c2_73, %c0_74, %c0_75], %138 {strides = array<i32>} : memref<4x8x256xbf16, #tpu.memory_space<vmem>>, vector<1x8x256xbf16>,
      %c2_76 = arith.constant 2 : index
      %c4_77 = arith.constant 4 : index
      %c0_78 = arith.constant 0 : index
      %139 = vector.load %arg10[%c2_76, %c4_77, %c0_78] : memref<4x8x256xbf16, #tpu.memory_space<vmem>>, vector<1x1x256xbf16>
      %140 = vector.shape_cast %139 : vector<1x1x256xbf16> to vector<1x256xbf16>
      %141 = vector.shape_cast %102 : vector<1x256xbf16> to vector<1x1x256xbf16>
      tpu.vector_store %arg10[%c2_76, %c4_77, %c0_78], %141 {strides = array<i32>} : memref<4x8x256xbf16, #tpu.memory_space<vmem>>, vector<1x1x256xbf16>,
      %142 = vector.extract_strided_slice %94 {offsets = [96, 0], sizes = [32, 256], strides = [1, 1]} : vector<128x256xf32> to vector<32x256xf32>
      %143 = arith.truncf %142 : vector<32x256xf32> to vector<32x256xbf16>
      %c3_79 = arith.constant 3 : index
      %c0_80 = arith.constant 0 : index
      %c0_81 = arith.constant 0 : index
      %144 = vector.load %arg9[%c3_79, %c0_80, %c0_81] : memref<4x32x256xbf16, #tpu.memory_space<vmem>>, vector<1x32x256xbf16>
      %145 = vector.shape_cast %144 : vector<1x32x256xbf16> to vector<32x256xbf16>
      %146 = vector.shape_cast %143 : vector<32x256xbf16> to vector<1x32x256xbf16>
      tpu.vector_store %arg9[%c3_79, %c0_80, %c0_81], %146 {strides = array<i32>} : memref<4x32x256xbf16, #tpu.memory_space<vmem>>, vector<1x32x256xbf16>,
      %147 = vector.extract_strided_slice %96 {offsets = [24, 0], sizes = [8, 256], strides = [1, 1]} : vector<32x256xf32> to vector<8x256xf32>
      %148 = arith.truncf %147 : vector<8x256xf32> to vector<8x256xbf16>
      %c3_82 = arith.constant 3 : index
      %c0_83 = arith.constant 0 : index
      %c0_84 = arith.constant 0 : index
      %149 = vector.load %arg10[%c3_82, %c0_83, %c0_84] : memref<4x8x256xbf16, #tpu.memory_space<vmem>>, vector<1x8x256xbf16>
      %150 = vector.shape_cast %149 : vector<1x8x256xbf16> to vector<8x256xbf16>
      %151 = vector.shape_cast %148 : vector<8x256xbf16> to vector<1x8x256xbf16>
      tpu.vector_store %arg10[%c3_82, %c0_83, %c0_84], %151 {strides = array<i32>} : memref<4x8x256xbf16, #tpu.memory_space<vmem>>, vector<1x8x256xbf16>,
      %c3_85 = arith.constant 3 : index
      %c4_86 = arith.constant 4 : index
      %c0_87 = arith.constant 0 : index
      %152 = vector.load %arg10[%c3_85, %c4_86, %c0_87] : memref<4x8x256xbf16, #tpu.memory_space<vmem>>, vector<1x1x256xbf16>
      %153 = vector.shape_cast %152 : vector<1x1x256xbf16> to vector<1x256xbf16>
      %154 = vector.shape_cast %102 : vector<1x256xbf16> to vector<1x1x256xbf16>
      tpu.vector_store %arg10[%c3_85, %c4_86, %c0_87], %154 {strides = array<i32>} : memref<4x8x256xbf16, #tpu.memory_space<vmem>>, vector<1x1x256xbf16>,
    } else {
    }
    %c0 = arith.constant 0 : index
    %c0_1 = arith.constant 0 : index
    %c0_2 = arith.constant 0 : index
    %3 = vector.load %arg3[%c0, %c0_1, %c0_2] : memref<1x4x128xf32, #tpu.memory_space<vmem>>, vector<1x4x128xf32>
    %4 = vector.shape_cast %3 : vector<1x4x128xf32> to vector<4x128xf32>
    %c0_3 = arith.constant 0 : index
    %c0_4 = arith.constant 0 : index
    %5 = vector.load %arg4[%c0_3, %c0_4] : memref<4x128xf32, #tpu.memory_space<vmem>>, vector<4x128xf32>
    %cst = arith.constant dense<0.000000e+00> : vector<128x128xf32>
    %6 = tpu.matmul %5, %4, %cst {dimension_numbers = #tpu.dot_dimension_numbers<[0], [0], [1], [1], [0, 1, 1, 1], [], []>} : vector<4x128xf32>, vector<4x128xf32>, vector<128x128xf32> -> vector<128x128xf32>
    %7 = arith.truncf %6 : vector<128x128xf32> to vector<128x128xbf16>
    %cst_5 = arith.constant 0.000000e+00 : f32
    %8 = vector.broadcast %cst_5 : f32 to vector<4x128xf32>
    %9 = vector.extract_strided_slice %7 {offsets = [0, 0], sizes = [32, 128], strides = [1, 1]} : vector<128x128xbf16> to vector<32x128xbf16>
    %c0_6 = arith.constant 0 : index
    %c0_7 = arith.constant 0 : index
    %c0_8 = arith.constant 0 : index
    %10 = vector.load %arg9[%c0_6, %c0_7, %c0_8] : memref<4x32x256xbf16, #tpu.memory_space<vmem>>, vector<1x32x256xbf16>
    %11 = vector.shape_cast %10 : vector<1x32x256xbf16> to vector<32x256xbf16>
    %cst_9 = arith.constant dense<0.000000e+00> : vector<128x256xf32>
    %12 = tpu.matmul %9, %11, %cst_9 {dimension_numbers = #tpu.dot_dimension_numbers<[0], [0], [1], [1], [0, 1, 1, 1], [], []>} : vector<32x128xbf16>, vector<32x256xbf16>, vector<128x256xf32> -> vector<128x256xf32>
    %cst_10 = arith.constant dense<0xFF800000> : vector<128xf32>
    %13 = vector.multi_reduction <maximumf>, %12, %cst_10 [1] : vector<128x256xf32> to vector<128xf32>
    %14 = vector.shape_cast %13 : vector<128xf32> to vector<128x1xf32>
    %15 = vector.broadcast %14 : vector<128x1xf32> to vector<128x256xf32>
    %16 = arith.subf %12, %15 : vector<128x256xf32>
    %17 = arith.truncf %16 : vector<128x256xf32> to vector<128x256xbf16>
    %18 = math.exp %17 : vector<128x256xbf16>
    %c0_11 = arith.constant 0 : index
    %c0_12 = arith.constant 0 : index
    %c0_13 = arith.constant 0 : index
    %19 = vector.load %arg10[%c0_11, %c0_12, %c0_13] : memref<4x8x256xbf16, #tpu.memory_space<vmem>>, vector<1x8x256xbf16>
    %20 = vector.shape_cast %19 : vector<1x8x256xbf16> to vector<8x256xbf16>
    %cst_14 = arith.constant dense<0.000000e+00> : vector<8x128xf32>
    %21 = tpu.matmul %20, %18, %cst_14 {dimension_numbers = #tpu.dot_dimension_numbers<[1], [1], [0], [0], [0, 0, 1, 0], [], []>} : vector<8x256xbf16>, vector<128x256xbf16>, vector<8x128xf32> -> vector<8x128xf32>
    %22 = vector.extract_strided_slice %21 {offsets = [0, 0], sizes = [4, 128], strides = [1, 1]} : vector<8x128xf32> to vector<4x128xf32>
    %23 = vector.extract_strided_slice %21 {offsets = [4, 0], sizes = [1, 128], strides = [1, 1]} : vector<8x128xf32> to vector<1x128xf32>
    %24 = tpu.reciprocal %23 {approx = true} : vector<1x128xf32> -> vector<1x128xf32>
    %25 = vector.broadcast %24 : vector<1x128xf32> to vector<4x128xf32>
    %26 = arith.mulf %22, %25 : vector<4x128xf32>
    %27 = arith.addf %8, %26 : vector<4x128xf32>
    %28 = vector.extract_strided_slice %7 {offsets = [32, 0], sizes = [32, 128], strides = [1, 1]} : vector<128x128xbf16> to vector<32x128xbf16>
    %c1 = arith.constant 1 : index
    %c0_15 = arith.constant 0 : index
    %c0_16 = arith.constant 0 : index
    %29 = vector.load %arg9[%c1, %c0_15, %c0_16] : memref<4x32x256xbf16, #tpu.memory_space<vmem>>, vector<1x32x256xbf16>
    %30 = vector.shape_cast %29 : vector<1x32x256xbf16> to vector<32x256xbf16>
    %cst_17 = arith.constant dense<0.000000e+00> : vector<128x256xf32>
    %31 = tpu.matmul %28, %30, %cst_17 {dimension_numbers = #tpu.dot_dimension_numbers<[0], [0], [1], [1], [0, 1, 1, 1], [], []>} : vector<32x128xbf16>, vector<32x256xbf16>, vector<128x256xf32> -> vector<128x256xf32>
    %cst_18 = arith.constant dense<0xFF800000> : vector<128xf32>
    %32 = vector.multi_reduction <maximumf>, %31, %cst_18 [1] : vector<128x256xf32> to vector<128xf32>
    %33 = vector.shape_cast %32 : vector<128xf32> to vector<128x1xf32>
    %34 = vector.broadcast %33 : vector<128x1xf32> to vector<128x256xf32>
    %35 = arith.subf %31, %34 : vector<128x256xf32>
    %36 = arith.truncf %35 : vector<128x256xf32> to vector<128x256xbf16>
    %37 = math.exp %36 : vector<128x256xbf16>
    %c1_19 = arith.constant 1 : index
    %c0_20 = arith.constant 0 : index
    %c0_21 = arith.constant 0 : index
    %38 = vector.load %arg10[%c1_19, %c0_20, %c0_21] : memref<4x8x256xbf16, #tpu.memory_space<vmem>>, vector<1x8x256xbf16>
    %39 = vector.shape_cast %38 : vector<1x8x256xbf16> to vector<8x256xbf16>
    %cst_22 = arith.constant dense<0.000000e+00> : vector<8x128xf32>
    %40 = tpu.matmul %39, %37, %cst_22 {dimension_numbers = #tpu.dot_dimension_numbers<[1], [1], [0], [0], [0, 0, 1, 0], [], []>} : vector<8x256xbf16>, vector<128x256xbf16>, vector<8x128xf32> -> vector<8x128xf32>
    %41 = vector.extract_strided_slice %40 {offsets = [0, 0], sizes = [4, 128], strides = [1, 1]} : vector<8x128xf32> to vector<4x128xf32>
    %42 = vector.extract_strided_slice %40 {offsets = [4, 0], sizes = [1, 128], strides = [1, 1]} : vector<8x128xf32> to vector<1x128xf32>
    %43 = tpu.reciprocal %42 {approx = true} : vector<1x128xf32> -> vector<1x128xf32>
    %44 = vector.broadcast %43 : vector<1x128xf32> to vector<4x128xf32>
    %45 = arith.mulf %41, %44 : vector<4x128xf32>
    %46 = arith.addf %27, %45 : vector<4x128xf32>
    %47 = vector.extract_strided_slice %7 {offsets = [64, 0], sizes = [32, 128], strides = [1, 1]} : vector<128x128xbf16> to vector<32x128xbf16>
    %c2 = arith.constant 2 : index
    %c0_23 = arith.constant 0 : index
    %c0_24 = arith.constant 0 : index
    %48 = vector.load %arg9[%c2, %c0_23, %c0_24] : memref<4x32x256xbf16, #tpu.memory_space<vmem>>, vector<1x32x256xbf16>
    %49 = vector.shape_cast %48 : vector<1x32x256xbf16> to vector<32x256xbf16>
    %cst_25 = arith.constant dense<0.000000e+00> : vector<128x256xf32>
    %50 = tpu.matmul %47, %49, %cst_25 {dimension_numbers = #tpu.dot_dimension_numbers<[0], [0], [1], [1], [0, 1, 1, 1], [], []>} : vector<32x128xbf16>, vector<32x256xbf16>, vector<128x256xf32> -> vector<128x256xf32>
    %cst_26 = arith.constant dense<0xFF800000> : vector<128xf32>
    %51 = vector.multi_reduction <maximumf>, %50, %cst_26 [1] : vector<128x256xf32> to vector<128xf32>
    %52 = vector.shape_cast %51 : vector<128xf32> to vector<128x1xf32>
    %53 = vector.broadcast %52 : vector<128x1xf32> to vector<128x256xf32>
    %54 = arith.subf %50, %53 : vector<128x256xf32>
    %55 = arith.truncf %54 : vector<128x256xf32> to vector<128x256xbf16>
    %56 = math.exp %55 : vector<128x256xbf16>
    %c2_27 = arith.constant 2 : index
    %c0_28 = arith.constant 0 : index
    %c0_29 = arith.constant 0 : index
    %57 = vector.load %arg10[%c2_27, %c0_28, %c0_29] : memref<4x8x256xbf16, #tpu.memory_space<vmem>>, vector<1x8x256xbf16>
    %58 = vector.shape_cast %57 : vector<1x8x256xbf16> to vector<8x256xbf16>
    %cst_30 = arith.constant dense<0.000000e+00> : vector<8x128xf32>
    %59 = tpu.matmul %58, %56, %cst_30 {dimension_numbers = #tpu.dot_dimension_numbers<[1], [1], [0], [0], [0, 0, 1, 0], [], []>} : vector<8x256xbf16>, vector<128x256xbf16>, vector<8x128xf32> -> vector<8x128xf32>
    %60 = vector.extract_strided_slice %59 {offsets = [0, 0], sizes = [4, 128], strides = [1, 1]} : vector<8x128xf32> to vector<4x128xf32>
    %61 = vector.extract_strided_slice %59 {offsets = [4, 0], sizes = [1, 128], strides = [1, 1]} : vector<8x128xf32> to vector<1x128xf32>
    %62 = tpu.reciprocal %61 {approx = true} : vector<1x128xf32> -> vector<1x128xf32>
    %63 = vector.broadcast %62 : vector<1x128xf32> to vector<4x128xf32>
    %64 = arith.mulf %60, %63 : vector<4x128xf32>
    %65 = arith.addf %46, %64 : vector<4x128xf32>
    %66 = vector.extract_strided_slice %7 {offsets = [96, 0], sizes = [32, 128], strides = [1, 1]} : vector<128x128xbf16> to vector<32x128xbf16>
    %c3 = arith.constant 3 : index
    %c0_31 = arith.constant 0 : index
    %c0_32 = arith.constant 0 : index
    %67 = vector.load %arg9[%c3, %c0_31, %c0_32] : memref<4x32x256xbf16, #tpu.memory_space<vmem>>, vector<1x32x256xbf16>
    %68 = vector.shape_cast %67 : vector<1x32x256xbf16> to vector<32x256xbf16>
    %cst_33 = arith.constant dense<0.000000e+00> : vector<128x256xf32>
    %69 = tpu.matmul %66, %68, %cst_33 {dimension_numbers = #tpu.dot_dimension_numbers<[0], [0], [1], [1], [0, 1, 1, 1], [], []>} : vector<32x128xbf16>, vector<32x256xbf16>, vector<128x256xf32> -> vector<128x256xf32>
    %cst_34 = arith.constant dense<0xFF800000> : vector<128xf32>
    %70 = vector.multi_reduction <maximumf>, %69, %cst_34 [1] : vector<128x256xf32> to vector<128xf32>
    %71 = vector.shape_cast %70 : vector<128xf32> to vector<128x1xf32>
    %72 = vector.broadcast %71 : vector<128x1xf32> to vector<128x256xf32>
    %73 = arith.subf %69, %72 : vector<128x256xf32>
    %74 = arith.truncf %73 : vector<128x256xf32> to vector<128x256xbf16>
    %75 = math.exp %74 : vector<128x256xbf16>
    %c3_35 = arith.constant 3 : index
    %c0_36 = arith.constant 0 : index
    %c0_37 = arith.constant 0 : index
    %76 = vector.load %arg10[%c3_35, %c0_36, %c0_37] : memref<4x8x256xbf16, #tpu.memory_space<vmem>>, vector<1x8x256xbf16>
    %77 = vector.shape_cast %76 : vector<1x8x256xbf16> to vector<8x256xbf16>
    %cst_38 = arith.constant dense<0.000000e+00> : vector<8x128xf32>
    %78 = tpu.matmul %77, %75, %cst_38 {dimension_numbers = #tpu.dot_dimension_numbers<[1], [1], [0], [0], [0, 0, 1, 0], [], []>} : vector<8x256xbf16>, vector<128x256xbf16>, vector<8x128xf32> -> vector<8x128xf32>
    %79 = vector.extract_strided_slice %78 {offsets = [0, 0], sizes = [4, 128], strides = [1, 1]} : vector<8x128xf32> to vector<4x128xf32>
    %80 = vector.extract_strided_slice %78 {offsets = [4, 0], sizes = [1, 128], strides = [1, 1]} : vector<8x128xf32> to vector<1x128xf32>
    %81 = tpu.reciprocal %80 {approx = true} : vector<1x128xf32> -> vector<1x128xf32>
    %82 = vector.broadcast %81 : vector<1x128xf32> to vector<4x128xf32>
    %83 = arith.mulf %79, %82 : vector<4x128xf32>
    %84 = arith.addf %65, %83 : vector<4x128xf32>
    %c0_39 = arith.constant 0 : index
    %c0_40 = arith.constant 0 : index
    %85 = vector.load %arg7[%c0_39, %c0_40] : memref<4x1xf32, #tpu.memory_space<vmem>>, vector<4x1xf32>
    %86 = vector.broadcast %85 : vector<4x1xf32> to vector<4x128xf32>
    %87 = arith.addf %84, %86 : vector<4x128xf32>
    %c0_41 = arith.constant 0 : index
    %c0_42 = arith.constant 0 : index
    %c0_43 = arith.constant 0 : index
    %88 = vector.load %arg8[%c0_41, %c0_42, %c0_43] : memref<1x4x128xf32, #tpu.memory_space<vmem>>, vector<1x4x128xf32>
    %89 = vector.shape_cast %88 : vector<1x4x128xf32> to vector<4x128xf32>
    %90 = vector.shape_cast %87 : vector<4x128xf32> to vector<1x4x128xf32>
    tpu.vector_store %arg8[%c0_41, %c0_42, %c0_43], %90 {strides = array<i32>} : memref<1x4x128xf32, #tpu.memory_space<vmem>>, vector<1x4x128xf32>,
    return
  }
  func.func @transform_0(%arg0: i32, %arg1: i32) -> (i32, i32, i32) {
    %c0_i32 = arith.constant 0 : i32
    %c0_i32_0 = arith.constant 0 : i32
    %c0_i32_1 = arith.constant 0 : i32
    return %arg0, %c0_i32, %c0_i32_0 : i32, i32, i32
  }
  func.func @transform_1(%arg0: i32, %arg1: i32) -> (i32, i32, i32) {
    %c0_i32 = arith.constant 0 : i32
    %c0_i32_0 = arith.constant 0 : i32
    return %arg0, %c0_i32, %arg1 : i32, i32, i32
  }
  func.func @transform_2(%arg0: i32, %arg1: i32) -> (i32, i32) {
    %c0_i32 = arith.constant 0 : i32
    %c0_i32_0 = arith.constant 0 : i32
    %c0_i32_1 = arith.constant 0 : i32
    return %c0_i32, %c0_i32_0 : i32, i32
  }
  func.func @transform_3(%arg0: i32, %arg1: i32) -> (i32, i32) {
    %c0_i32 = arith.constant 0 : i32
    %c0_i32_0 = arith.constant 0 : i32
    %c0_i32_1 = arith.constant 0 : i32
    return %c0_i32, %c0_i32_0 : i32, i32
  }
  func.func @transform_4(%arg0: i32, %arg1: i32) -> (i32, i32) {
    %c0_i32 = arith.constant 0 : i32
    %c0_i32_0 = arith.constant 0 : i32
    %c0_i32_1 = arith.constant 0 : i32
    return %c0_i32, %c0_i32_0 : i32, i32
  }
  func.func @transform_5(%arg0: i32, %arg1: i32) -> (i32, i32) {
    %c0_i32 = arith.constant 0 : i32
    %c0_i32_0 = arith.constant 0 : i32
    %c0_i32_1 = arith.constant 0 : i32
    return %c0_i32, %c0_i32_0 : i32, i32
  }
  func.func @transform_6(%arg0: i32, %arg1: i32) -> (i32, i32, i32) {
    %c0_i32 = arith.constant 0 : i32
    %c0_i32_0 = arith.constant 0 : i32
    return %arg0, %c0_i32, %arg1 : i32, i32, i32
  }
}

</mosaic_0001>

<llo_original>
// kernel: attention_forward.1
$region0: #{attention_forward.1}
  #allocation0 [shape = 'u32[]', space=smem, size = 0x4, offset = 0x4, fixed_abs, tag = 'smem constant byte address 0x4 - core index']
  #allocation1 [shape = 'u32[72,128]{1,0:T(1,128)}', space=vmem, size = 0x9000, scoped, tag = 'internal scratch']
  #allocation2 [shape = 'bf16[4,32,256]{2,1,0:T(8,128)(2,1)}', space=vmem, size = 0x10000, scoped, tag = 'scratch operand']
  #allocation3 [shape = 'bf16[4,8,256]{2,1,0:T(8,128)(2,1)}', space=vmem, size = 0x4000, scoped, tag = 'scratch operand']
  %s0 = inlined_call_operand.vmem [shape: f32[2,4,256], index: 0, kind: input, shape index: {}, may-alias: {0,1}]
  %s1 = inlined_call_operand.vmem [shape: f32[2,4,256], index: 1, kind: input, shape index: {}, may-alias: {0,1}]
  %s2 = inlined_call_operand.vmem [shape: f32[4,128], index: 2, kind: input, shape index: {}]
  %s3 = inlined_call_operand.vmem [shape: f32[4,128], index: 3, kind: input, shape index: {}]
  %s4 = inlined_call_operand.vmem [shape: f32[4,32], index: 4, kind: input, shape index: {}]
  %s5 = inlined_call_operand.vmem [shape: f32[4,1], index: 5, kind: input, shape index: {}]
  %s6 = inlined_call_operand.vmem [shape: f32[2,4,256], index: 6, kind: output, shape index: {}]
  %s7 = sld [smem:[#allocation0]]
  $region61: #{attention_forward.1} parent=0
    _
  %s9 = ssub.s32 1, %s7
  %s10 = scalar_select 0, %s9, %s7
  loop: start=0, step=1, limit=6
  $region2: #{attention_forward.1} parent=0 // loop_pre_header
    _
  $region3: #{attention_forward.1} parent=0 // loop_header
    %s12 = sphi 0, %s16
    %p13 = scmp.ge.s32.totalorder %s12, 6
    %s19 = sphi 0, %s31
    %s20 = sphi 0, %s27
    %s21 = sphi 0, %s19
    %s22 = sphi 0, %s20
    %s23 = sphi 0, %s21
    %s24 = sphi 0, %s22
    %s34 = sphi 0, %s36
    %s37 = sphi 0, %s34
    %s38 = sphi 0, %s37
    %s54 = sphi 0, %s38
    %s62 = sphi 0, %s64
    %s65 = sphi 0, %s62
    %s66 = sphi 0, %s65
    %s82 = sphi 0, %s66
    %s86 = sphi 0, %s86
    %s88 = sphi 0, %s86
    %s89 = sphi 0, %s88
    %s103 = sphi 0, %s89
    %s107 = sphi 0, %s107
    %s109 = sphi 0, %s107
    %s110 = sphi 0, %s109
    %s124 = sphi 0, %s110
    %s128 = sphi 0, %s128
    %s130 = sphi 0, %s128
    %s131 = sphi 0, %s130
    %s145 = sphi 0, %s131
    %s149 = sphi 0, %s149
    %s151 = sphi 0, %s149
    %s152 = sphi 0, %s151
    %s166 = sphi 0, %s152
    %s174 = sphi 0, %s176
    %s177 = sphi 0, %s174
    %s178 = sphi 0, %s177
    %s194 = sphi 0, %s178
  $region4: #{attention_forward.1} parent=0 // loop_header_branch
    %15 = sbr.rel (%p13) target = $region8
  $region5: #{attention_forward.1} parent=0 // loop_body
    %s17 = ssub.s32 %s12, 1
    %s18 = ssub.s32 %s12, 2
    %s25 = sadd.s32 1, %s20
    %p26 = scmp.ge.s32.totalorder %s25, 2
    %s27 = scalar_select %p26, 0, %s25
    %s28 = sadd.s32 1, %s19
    %s29 = scalar_select %p26, %s28, %s19
    %p30 = scmp.ge.s32.totalorder %s29, 2
    %s31 = scalar_select %p30, 0, %s29
    %s32 = ssub.s32 %s19, %s31
    %p33 = scmp.eq.s32.totalorder %s32, 0
    %s35 = sadd.s32 %s34, 1
    %s36 = scalar_select %p33, %s34, %s35
    %p39 = pneg %p33
    %p40 = scmp.eq.s32.totalorder %s12, 3
    %p41 = por %p39, %p40
    %p42 = scmp.ne.s32.totalorder %s34, %s37
    %p43 = scmp.eq.s32.totalorder %s12, 0
    %p44 = por %p42, %p43
    %p45 = scmp.ne.s32.totalorder %s34, %s37
    %p46 = scmp.eq.s32.totalorder %s17, 3
    %p47 = por %p45, %p46
    %p48 = scmp.ne.s32.totalorder %s37, %s38
    %p49 = scmp.eq.s32.totalorder %s17, 0
    %p50 = por %p48, %p49
    %p51 = scmp.ne.s32.totalorder %s37, %s38
    %p52 = scmp.eq.s32.totalorder %s18, 3
    %p53 = por %p51, %p52
    %p55 = scmp.ne.s32.totalorder %s38, %s54
    %p56 = scmp.eq.s32.totalorder %s18, 0
    %p57 = por %p55, %p56
    %s58 = ssub.s32 %s19, %s31
    %s59 = ssub.s32 %s20, %s27
    %s60 = sor.u32 %s58, %s59
    %p61 = scmp.eq.s32.totalorder %s60, 0
    %s63 = sadd.s32 %s62, 1
    %s64 = scalar_select %p61, %s62, %s63
    %p67 = pneg %p61
    %p68 = scmp.eq.s32.totalorder %s12, 3
    %p69 = por %p67, %p68
    %p70 = scmp.ne.s32.totalorder %s62, %s65
    %p71 = scmp.eq.s32.totalorder %s12, 0
    %p72 = por %p70, %p71
    %p73 = scmp.ne.s32.totalorder %s62, %s65
    %p74 = scmp.eq.s32.totalorder %s17, 3
    %p75 = por %p73, %p74
    %p76 = scmp.ne.s32.totalorder %s65, %s66
    %p77 = scmp.eq.s32.totalorder %s17, 0
    %p78 = por %p76, %p77
    %p79 = scmp.ne.s32.totalorder %s65, %s66
    %p80 = scmp.eq.s32.totalorder %s18, 3
    %p81 = por %p79, %p80
    %p83 = scmp.ne.s32.totalorder %s66, %s82
    %p84 = scmp.eq.s32.totalorder %s18, 0
    %p85 = por %p83, %p84
    %s87 = sadd.s32 %s86, 1
    %p90 = scmp.eq.s32.totalorder %s12, 3
    %p91 = scmp.ne.s32.totalorder %s86, %s88
    %p92 = scmp.eq.s32.totalorder %s12, 0
    %p93 = por %p91, %p92
    %p94 = scmp.ne.s32.totalorder %s86, %s88
    %p95 = scmp.eq.s32.totalorder %s17, 3
    %p96 = por %p94, %p95
    %p97 = scmp.ne.s32.totalorder %s88, %s89
    %p98 = scmp.eq.s32.totalorder %s17, 0
    %p99 = por %p97, %p98
    %p100 = scmp.ne.s32.totalorder %s88, %s89
    %p101 = scmp.eq.s32.totalorder %s18, 3
    %p102 = por %p100, %p101
    %p104 = scmp.ne.s32.totalorder %s89, %s103
    %p105 = scmp.eq.s32.totalorder %s18, 0
    %p106 = por %p104, %p105
    %s108 = sadd.s32 %s107, 1
    %p111 = scmp.eq.s32.totalorder %s12, 3
    %p112 = scmp.ne.s32.totalorder %s107, %s109
    %p113 = scmp.eq.s32.totalorder %s12, 0
    %p114 = por %p112, %p113
    %p115 = scmp.ne.s32.totalorder %s107, %s109
    %p116 = scmp.eq.s32.totalorder %s17, 3
    %p117 = por %p115, %p116
    %p118 = scmp.ne.s32.totalorder %s109, %s110
    %p119 = scmp.eq.s32.totalorder %s17, 0
    %p120 = por %p118, %p119
    %p121 = scmp.ne.s32.totalorder %s109, %s110
    %p122 = scmp.eq.s32.totalorder %s18, 3
    %p123 = por %p121, %p122
    %p125 = scmp.ne.s32.totalorder %s110, %s124
    %p126 = scmp.eq.s32.totalorder %s18, 0
    %p127 = por %p125, %p126
    %s129 = sadd.s32 %s128, 1
    %p132 = scmp.eq.s32.totalorder %s12, 3
    %p133 = scmp.ne.s32.totalorder %s128, %s130
    %p134 = scmp.eq.s32.totalorder %s12, 0
    %p135 = por %p133, %p134
    %p136 = scmp.ne.s32.totalorder %s128, %s130
    %p137 = scmp.eq.s32.totalorder %s17, 3
    %p138 = por %p136, %p137
    %p139 = scmp.ne.s32.totalorder %s130, %s131
    %p140 = scmp.eq.s32.totalorder %s17, 0
    %p141 = por %p139, %p140
    %p142 = scmp.ne.s32.totalorder %s130, %s131
    %p143 = scmp.eq.s32.totalorder %s18, 3
    %p144 = por %p142, %p143
    %p146 = scmp.ne.s32.totalorder %s131, %s145
    %p147 = scmp.eq.s32.totalorder %s18, 0
    %p148 = por %p146, %p147
    %s150 = sadd.s32 %s149, 1
    %p153 = scmp.eq.s32.totalorder %s12, 3
    %p154 = scmp.ne.s32.totalorder %s149, %s151
    %p155 = scmp.eq.s32.totalorder %s12, 0
    %p156 = por %p154, %p155
    %p157 = scmp.ne.s32.totalorder %s149, %s151
    %p158 = scmp.eq.s32.totalorder %s17, 3
    %p159 = por %p157, %p158
    %p160 = scmp.ne.s32.totalorder %s151, %s152
    %p161 = scmp.eq.s32.totalorder %s17, 0
    %p162 = por %p160, %p161
    %p163 = scmp.ne.s32.totalorder %s151, %s152
    %p164 = scmp.eq.s32.totalorder %s18, 3
    %p165 = por %p163, %p164
    %p167 = scmp.ne.s32.totalorder %s152, %s166
    %p168 = scmp.eq.s32.totalorder %s18, 0
    %p169 = por %p167, %p168
    %s170 = ssub.s32 %s19, %s31
    %s171 = ssub.s32 %s20, %s27
    %s172 = sor.u32 %s170, %s171
    %p173 = scmp.eq.s32.totalorder %s172, 0
    %s175 = sadd.s32 %s174, 1
    %s176 = scalar_select %p173, %s174, %s175
    %p179 = pneg %p173
    %p180 = scmp.eq.s32.totalorder %s12, 3
    %p181 = por %p179, %p180
    %p182 = scmp.ne.s32.totalorder %s174, %s177
    %p183 = scmp.eq.s32.totalorder %s12, 0
    %p184 = por %p182, %p183
    %p185 = scmp.ne.s32.totalorder %s174, %s177
    %p186 = scmp.eq.s32.totalorder %s17, 3
    %p187 = por %p185, %p186
    %p188 = scmp.ne.s32.totalorder %s177, %s178
    %p189 = scmp.eq.s32.totalorder %s17, 0
    %p190 = por %p188, %p189
    %p191 = scmp.ne.s32.totalorder %s177, %s178
    %p192 = scmp.eq.s32.totalorder %s18, 3
    %p193 = por %p191, %p192
    %p195 = scmp.ne.s32.totalorder %s178, %s194
    %p196 = scmp.eq.s32.totalorder %s18, 0
    %p197 = por %p195, %p196
    %p198 = scmp.le.s32.totalorder 1, %s12
    %p199 = scmp.lt.s32.totalorder %s12, 5
    %p200 = pnand %p198, %p199
    %p201 = pneg %p200
    // Predicated region
    $region9: #{attention_forward.1} parent=5 // pred_check
      _
    $region10: #{attention_forward.1} parent=5 // pred_check_branch
      %203 = sbr.rel (%p200) target = $region12
    $region11: #{attention_forward.1} parent=5 // pred_region
      %s204 = ssub.s32 %s12, 1
      // Predicated region
      $region13: #{attention_forward.1} parent=11 // pred_check
        %p205 = pneg %p99
      $region14: #{attention_forward.1} parent=11 // pred_check_branch
        %207 = sbr.rel (%p205) target = $region16
      $region15: #{attention_forward.1} parent=11 // pred_region
        _
      $region16: #{attention_forward.1} parent=11 // pred_fallthru
        _
      // Predicated region
      $region17: #{attention_forward.1} parent=11 // pred_check
        %p208 = pneg %p120
      $region18: #{attention_forward.1} parent=11 // pred_check_branch
        %210 = sbr.rel (%p208) target = $region20
      $region19: #{attention_forward.1} parent=11 // pred_region
        _
      $region20: #{attention_forward.1} parent=11 // pred_fallthru
        _
      // Predicated region
      $region21: #{attention_forward.1} parent=11 // pred_check
        %p211 = pneg %p141
      $region22: #{attention_forward.1} parent=11 // pred_check_branch
        %213 = sbr.rel (%p211) target = $region24
      $region23: #{attention_forward.1} parent=11 // pred_region
        _
      $region24: #{attention_forward.1} parent=11 // pred_fallthru
        _
      // Predicated region
      $region25: #{attention_forward.1} parent=11 // pred_check
        %p214 = pneg %p162
      $region26: #{attention_forward.1} parent=11 // pred_check_branch
        %216 = sbr.rel (%p214) target = $region28
      $region27: #{attention_forward.1} parent=11 // pred_region
        _
      $region28: #{attention_forward.1} parent=11 // pred_fallthru
        _
    $region12: #{attention_forward.1} parent=5 // pred_fallthru
      _
    %p217 = scmp.lt.s32.totalorder %s12, 4
    // Predicated region
    $region29: #{attention_forward.1} parent=5 // pred_check
      %p218 = pneg %p217
    $region30: #{attention_forward.1} parent=5 // pred_check_branch
      %220 = sbr.rel (%p218) target = $region32
    $region31: #{attention_forward.1} parent=5 // pred_region
      // Predicated region
      $region33: #{attention_forward.1} parent=31 // pred_check
        %p221 = pneg %p44
      $region34: #{attention_forward.1} parent=31 // pred_check_branch
        %223 = sbr.rel (%p221) target = $region36
      $region35: #{attention_forward.1} parent=31 // pred_region
        %p224 = scmp.lt.s32.totalorder %s19, 1
        %s225 = scalar_select %p224, %s19, 1
        %s226 = smul.addr %s225, 2
        %s227 = smul.addr %s226, 4
        %s228 = scalar_lea.vmem %s0, %s227
      $region36: #{attention_forward.1} parent=31 // pred_fallthru
        _
      // Predicated region
      $region37: #{attention_forward.1} parent=31 // pred_check
        %p229 = pneg %p72
      $region38: #{attention_forward.1} parent=31 // pred_check_branch
        %231 = sbr.rel (%p229) target = $region40
      $region39: #{attention_forward.1} parent=31 // pred_region
        %p232 = scmp.lt.s32.totalorder %s19, 1
        %s233 = scalar_select %p232, %s19, 1
        %p234 = scmp.lt.s32.totalorder %s20, 1
        %s235 = scalar_select %p234, %s20, 1
        %s236 = smul.addr %s233, 2
        %s237 = sadd.s32 %s235, %s236
        %s238 = smul.addr %s237, 4
        %s239 = scalar_lea.vmem %s1, %s238
      $region40: #{attention_forward.1} parent=31 // pred_fallthru
        _
    $region32: #{attention_forward.1} parent=5 // pred_fallthru
      _
    %p240 = scmp.le.s32.totalorder 1, %s12
    %p241 = scmp.lt.s32.totalorder %s12, 5
    %p242 = pnand %p240, %p241
    %p243 = pneg %p242
    // Predicated region
    $region41: #{attention_forward.1} parent=5 // pred_check
      _
    $region42: #{attention_forward.1} parent=5 // pred_check_branch
      %245 = sbr.rel (%p242) target = $region44
    $region43: #{attention_forward.1} parent=5 // pred_region
      %s246 = ssub.s32 %s12, 1
      %p247 = scmp.lt.s32.totalorder %s21, 1
      %s248 = scalar_select %p247, %s21, 1
      %s249 = smul.addr %s248, 2
      %s250 = smul.addr %s249, 4
      %s251 = scalar_lea.vmem %s0, %s250
      %p252 = pneg %p50
      %p253 = pneg %p47
      %p254 = scmp.lt.s32.totalorder %s21, 1
      %s255 = scalar_select %p254, %s21, 1
      %p256 = scmp.lt.s32.totalorder %s22, 1
      %s257 = scalar_select %p256, %s22, 1
      %s258 = smul.addr %s255, 2
      %s259 = sadd.s32 %s257, %s258
      %s260 = smul.addr %s259, 4
      %s261 = scalar_lea.vmem %s1, %s260
      %p262 = pneg %p78
      %p263 = pneg %p75
      %p264 = pneg %p99
      %p265 = pneg %p96
      %p266 = pneg %p120
      %p267 = pneg %p117
      %p268 = pneg %p141
      %p269 = pneg %p138
      %p270 = pneg %p162
      %p271 = pneg %p159
      %p272 = pneg %p190
      %p273 = pneg %p187
      %p274 = scmp.lt.s32.totalorder %s21, 1
      %s275 = scalar_select %p274, %s21, 1
      %p276 = scmp.lt.s32.totalorder %s22, 1
      %s277 = scalar_select %p276, %s22, 1
      %s278 = smul.addr %s275, 2
      %s279 = sadd.s32 %s277, %s278
      %s280 = smul.addr %s279, 4
      %s281 = scalar_lea.vmem %s6, %s280
      %p282 = scmp.lt.s32.totalorder %s21, 1
      %s283 = scalar_select %p282, %s21, 1
      %s284 = smul.addr %s283, 2
      %s285 = smul.addr %s284, 4
      %s286 = scalar_lea.vmem %s0, %s285
      %p287 = scmp.lt.s32.totalorder %s21, 1
      %s288 = scalar_select %p287, %s21, 1
      %p289 = scmp.lt.s32.totalorder %s22, 1
      %s290 = scalar_select %p289, %s22, 1
      %s291 = smul.addr %s288, 2
      %s292 = sadd.s32 %s290, %s291
      %s293 = smul.addr %s292, 4
      %s294 = scalar_lea.vmem %s1, %s293
      %p295 = scmp.lt.s32.totalorder %s21, 1
      %s296 = scalar_select %p295, %s21, 1
      %p297 = scmp.lt.s32.totalorder %s22, 1
      %s298 = scalar_select %p297, %s22, 1
      %s299 = smul.addr %s296, 2
      %s300 = sadd.s32 %s298, %s299
      %s301 = smul.addr %s300, 4
      %s302 = scalar_lea.vmem %s6, %s301
      %p304 = scmp.eq.s32.totalorder %s22, 0
      // Predicated region
      $region45: #{attention_forward.1} parent=43 // pred_check
        %p305 = pneg %p304
      $region46: #{attention_forward.1} parent=43 // pred_check_branch
        %307 = sbr.rel (%p305) target = $region48
      $region47: #{attention_forward.1} parent=43 // pred_region
        %v308 = vld [vmem:[%s286] sm:$0xff]
        %v309 = vld [vmem:[%s3] sm:$0xf]
        %310 = vxpose.xlu0.b32.start [1/16] %v309, 128
        %311 = vxpose.xlu0.b32.cont [2/16] 0.0, 128
        %312 = vxpose.xlu0.b32.cont [3/16] 0.0, 128
        %313 = vxpose.xlu0.b32.cont [4/16] 0.0, 128
        %314 = vxpose.xlu0.b32.cont [5/16] 0.0, 128
        %315 = vxpose.xlu0.b32.cont [6/16] 0.0, 128
        %316 = vxpose.xlu0.b32.cont [7/16] 0.0, 128
        %317 = vxpose.xlu0.b32.cont [8/16] 0.0, 128
        %318 = vxpose.xlu0.b32.cont [9/16] 0.0, 128
        %319 = vxpose.xlu0.b32.cont [10/16] 0.0, 128
        %320 = vxpose.xlu0.b32.cont [11/16] 0.0, 128
        %321 = vxpose.xlu0.b32.cont [12/16] 0.0, 128
        %322 = vxpose.xlu0.b32.cont [13/16] 0.0, 128
        %323 = vxpose.xlu0.b32.cont [14/16] 0.0, 128
        %324 = vxpose.xlu0.b32.cont [15/16] 0.0, 128
        %325 = vxpose.xlu0.b32.end [16/16] 0.0, 128
        %v326 = vpop.trf.xlu0
        %v327 = vpop.trf.xlu0
        %v328 = vpop.trf.xlu0
        %v329 = vpop.trf.xlu0
        %v330 = vpop.trf.xlu0
        %v331 = vpop.trf.xlu0
        %v332 = vpop.trf.xlu0
        %v333 = vpop.trf.xlu0
        %v334 = vpop.trf.xlu0
        %v335 = vpop.trf.xlu0
        %v336 = vpop.trf.xlu0
        %v337 = vpop.trf.xlu0
        %v338 = vpop.trf.xlu0
        %v339 = vpop.trf.xlu0
        %v340 = vpop.trf.xlu0
        %v341 = vpop.trf.xlu0
        %343 = vst [vmem:[#allocation1] ss:$2 sm:$0xff] %v308
        %v344 = vld.sshfl [vmem:[#allocation1] sm:$0xff pattern:$0x75316420]
        %v345 = vld.sshfl [vmem:[#allocation1 + $0x8] sm:$0xff pattern:$0x75316420]
        %vm346 = vcmask 31744
        %v348 = vsel %vm346, %v326, 0
        %v351 = vsel %vm346, %v327, 0
        %v354 = vsel %vm346, %v328, 0
        %v357 = vsel %vm346, %v329, 0
        %v360 = vsel %vm346, %v330, 0
        %v363 = vsel %vm346, %v331, 0
        %v366 = vsel %vm346, %v332, 0
        %v369 = vsel %vm346, %v333, 0
        %v372 = vsel %vm346, %v334, 0
        %v375 = vsel %vm346, %v335, 0
        %v378 = vsel %vm346, %v336, 0
        %v381 = vsel %vm346, %v337, 0
        %v384 = vsel %vm346, %v338, 0
        %v387 = vsel %vm346, %v339, 0
        %v390 = vsel %vm346, %v340, 0
        %v393 = vsel %vm346, %v341, 0
        %vm395 = vcmask 1043456
        %v396 = vsel %vm395, %v344, 0
        %v398 = vsel %vm395, %v345, 0
        %400 = vmatpush.msra.mxu0 0.0
        %401 = vmatpush.msra.mxu0 0.0
        %402 = vmatpush.msra.mxu0 0.0
        %403 = vmatpush.msra.mxu0 0.0
        %404 = vmatpush.msra.mxu0 0.0
        %405 = vmatpush.msra.mxu0 0.0
        %406 = vmatpush.msra.mxu0 0.0
        %407 = vmatpush.msra.mxu0 0.0
        %408 = vmatpush.msra.mxu0 0.0
        %409 = vmatpush.msra.mxu0 0.0
        %410 = vmatpush.msra.mxu0 0.0
        %411 = vmatpush.msra.mxu0 0.0
        %412 = vmatpush.msra.mxu0 0.0
        %413 = vmatpush.msra.mxu0 0.0
        %414 = vmatpush.msra.mxu0 0.0
        %415 = vmatpush.msra.mxu0 %v396
        %416 = vmatmul.f32.gmra.mxu0 %v348
        %v417 = vpop.f32.mrf.mxu0
        %v418 = vadd.f32 0.0, %v417
        %419 = vmatmul.f32.gmra.mxu0 %v351
        %v420 = vpop.f32.mrf.mxu0
        %v421 = vadd.f32 0.0, %v420
        %422 = vmatmul.f32.gmra.mxu0 %v354
        %v423 = vpop.f32.mrf.mxu0
        %v424 = vadd.f32 0.0, %v423
        %425 = vmatmul.f32.gmra.mxu0 %v357
        %v426 = vpop.f32.mrf.mxu0
        %v427 = vadd.f32 0.0, %v426
        %428 = vmatmul.f32.gmra.mxu0 %v360
        %v429 = vpop.f32.mrf.mxu0
        %v430 = vadd.f32 0.0, %v429
        %431 = vmatmul.f32.gmra.mxu0 %v363
        %v432 = vpop.f32.mrf.mxu0
        %v433 = vadd.f32 0.0, %v432
        %434 = vmatmul.f32.gmra.mxu0 %v366
        %v435 = vpop.f32.mrf.mxu0
        %v436 = vadd.f32 0.0, %v435
        %437 = vmatmul.f32.gmra.mxu0 %v369
        %v438 = vpop.f32.mrf.mxu0
        %v439 = vadd.f32 0.0, %v438
        %440 = vmatmul.f32.gmra.mxu0 %v372
        %v441 = vpop.f32.mrf.mxu0
        %v442 = vadd.f32 0.0, %v441
        %443 = vmatmul.f32.gmra.mxu0 %v375
        %v444 = vpop.f32.mrf.mxu0
        %v445 = vadd.f32 0.0, %v444
        %446 = vmatmul.f32.gmra.mxu0 %v378
        %v447 = vpop.f32.mrf.mxu0
        %v448 = vadd.f32 0.0, %v447
        %449 = vmatmul.f32.gmra.mxu0 %v381
        %v450 = vpop.f32.mrf.mxu0
        %v451 = vadd.f32 0.0, %v450
        %452 = vmatmul.f32.gmra.mxu0 %v384
        %v453 = vpop.f32.mrf.mxu0
        %v454 = vadd.f32 0.0, %v453
        %455 = vmatmul.f32.gmra.mxu0 %v387
        %v456 = vpop.f32.mrf.mxu0
        %v457 = vadd.f32 0.0, %v456
        %458 = vmatmul.f32.gmra.mxu0 %v390
        %v459 = vpop.f32.mrf.mxu0
        %v460 = vadd.f32 0.0, %v459
        %461 = vmatmul.f32.gmra.mxu0 %v393
        %v462 = vpop.f32.mrf.mxu0
        %v463 = vadd.f32 0.0, %v462
        %464 = vdwg.mxu0
        %465 = vmatpush.msra.mxu0 0.0
        %466 = vmatpush.msra.mxu0 0.0
        %467 = vmatpush.msra.mxu0 0.0
        %468 = vmatpush.msra.mxu0 0.0
        %469 = vmatpush.msra.mxu0 0.0
        %470 = vmatpush.msra.mxu0 0.0
        %471 = vmatpush.msra.mxu0 0.0
        %472 = vmatpush.msra.mxu0 0.0
        %473 = vmatpush.msra.mxu0 0.0
        %474 = vmatpush.msra.mxu0 0.0
        %475 = vmatpush.msra.mxu0 0.0
        %476 = vmatpush.msra.mxu0 0.0
        %477 = vmatpush.msra.mxu0 0.0
        %478 = vmatpush.msra.mxu0 0.0
        %479 = vmatpush.msra.mxu0 0.0
        %480 = vmatpush.msra.mxu0 %v398
        %481 = vmatmul.f32.gmra.mxu0 %v348
        %v482 = vpop.f32.mrf.mxu0
        %v483 = vadd.f32 0.0, %v482
        %484 = vmatmul.f32.gmra.mxu0 %v351
        %v485 = vpop.f32.mrf.mxu0
        %v486 = vadd.f32 0.0, %v485
        %487 = vmatmul.f32.gmra.mxu0 %v354
        %v488 = vpop.f32.mrf.mxu0
        %v489 = vadd.f32 0.0, %v488
        %490 = vmatmul.f32.gmra.mxu0 %v357
        %v491 = vpop.f32.mrf.mxu0
        %v492 = vadd.f32 0.0, %v491
        %493 = vmatmul.f32.gmra.mxu0 %v360
        %v494 = vpop.f32.mrf.mxu0
        %v495 = vadd.f32 0.0, %v494
        %496 = vmatmul.f32.gmra.mxu0 %v363
        %v497 = vpop.f32.mrf.mxu0
        %v498 = vadd.f32 0.0, %v497
        %499 = vmatmul.f32.gmra.mxu0 %v366
        %v500 = vpop.f32.mrf.mxu0
        %v501 = vadd.f32 0.0, %v500
        %502 = vmatmul.f32.gmra.mxu0 %v369
        %v503 = vpop.f32.mrf.mxu0
        %v504 = vadd.f32 0.0, %v503
        %505 = vmatmul.f32.gmra.mxu0 %v372
        %v506 = vpop.f32.mrf.mxu0
        %v507 = vadd.f32 0.0, %v506
        %508 = vmatmul.f32.gmra.mxu0 %v375
        %v509 = vpop.f32.mrf.mxu0
        %v510 = vadd.f32 0.0, %v509
        %511 = vmatmul.f32.gmra.mxu0 %v378
        %v512 = vpop.f32.mrf.mxu0
        %v513 = vadd.f32 0.0, %v512
        %514 = vmatmul.f32.gmra.mxu0 %v381
        %v515 = vpop.f32.mrf.mxu0
        %v516 = vadd.f32 0.0, %v515
        %517 = vmatmul.f32.gmra.mxu0 %v384
        %v518 = vpop.f32.mrf.mxu0
        %v519 = vadd.f32 0.0, %v518
        %520 = vmatmul.f32.gmra.mxu0 %v387
        %v521 = vpop.f32.mrf.mxu0
        %v522 = vadd.f32 0.0, %v521
        %523 = vmatmul.f32.gmra.mxu0 %v390
        %v524 = vpop.f32.mrf.mxu0
        %v525 = vadd.f32 0.0, %v524
        %526 = vmatmul.f32.gmra.mxu0 %v393
        %v527 = vpop.f32.mrf.mxu0
        %v528 = vadd.f32 0.0, %v527
        %529 = vdwg.mxu0
        %v530 = vld [vmem:[%s4] sm:$0xf]
        %531 = vxpose.xlu0.b32.start [1/16] %v530, 128
        %532 = vxpose.xlu0.b32.cont [2/16] 0.0, 128
        %533 = vxpose.xlu0.b32.cont [3/16] 0.0, 128
        %534 = vxpose.xlu0.b32.cont [4/16] 0.0, 128
        %535 = vxpose.xlu0.b32.cont [5/16] 0.0, 128
        %536 = vxpose.xlu0.b32.cont [6/16] 0.0, 128
        %537 = vxpose.xlu0.b32.cont [7/16] 0.0, 128
        %538 = vxpose.xlu0.b32.cont [8/16] 0.0, 128
        %539 = vxpose.xlu0.b32.cont [9/16] 0.0, 128
        %540 = vxpose.xlu0.b32.cont [10/16] 0.0, 128
        %541 = vxpose.xlu0.b32.cont [11/16] 0.0, 128
        %542 = vxpose.xlu0.b32.cont [12/16] 0.0, 128
        %543 = vxpose.xlu0.b32.cont [13/16] 0.0, 128
        %544 = vxpose.xlu0.b32.cont [14/16] 0.0, 128
        %545 = vxpose.xlu0.b32.cont [15/16] 0.0, 128
        %546 = vxpose.xlu0.b32.end [16/16] 0.0, 128
        %v547 = vpop.trf.xlu0
        %v548 = vpop.trf.xlu0
        %v549 = vpop.trf.xlu0
        %v550 = vpop.trf.xlu0
        %v551 = vpop.trf.xlu0
        %v552 = vpop.trf.xlu0
        %v553 = vpop.trf.xlu0
        %v554 = vpop.trf.xlu0
        %v555 = vpop.trf.xlu0
        %v556 = vpop.trf.xlu0
        %v557 = vpop.trf.xlu0
        %v558 = vpop.trf.xlu0
        %v559 = vpop.trf.xlu0
        %v560 = vpop.trf.xlu0
        %v561 = vpop.trf.xlu0
        %v562 = vpop.trf.xlu0
        %563 = vst [vmem:[#allocation1] ss:$2 sm:$0xff] %v308
        %v564 = vld.sshfl [vmem:[#allocation1] sm:$0xff pattern:$0x75316420]
        %v565 = vld.sshfl [vmem:[#allocation1 + $0x8] sm:$0xff pattern:$0x75316420]
        %v567 = vsel %vm346, %v547, 0
        %v570 = vsel %vm346, %v548, 0
        %v573 = vsel %vm346, %v549, 0
        %v576 = vsel %vm346, %v550, 0
        %v578 = vsel %vm395, %v564, 0
        %v580 = vsel %vm395, %v565, 0
        %582 = vmatpush.msra.mxu0 0.0
        %583 = vmatpush.msra.mxu0 0.0
        %584 = vmatpush.msra.mxu0 0.0
        %585 = vmatpush.msra.mxu0 0.0
        %586 = vmatpush.msra.mxu0 0.0
        %587 = vmatpush.msra.mxu0 0.0
        %588 = vmatpush.msra.mxu0 0.0
        %589 = vmatpush.msra.mxu0 0.0
        %590 = vmatpush.msra.mxu0 0.0
        %591 = vmatpush.msra.mxu0 0.0
        %592 = vmatpush.msra.mxu0 0.0
        %593 = vmatpush.msra.mxu0 0.0
        %594 = vmatpush.msra.mxu0 0.0
        %595 = vmatpush.msra.mxu0 0.0
        %596 = vmatpush.msra.mxu0 0.0
        %597 = vmatpush.msra.mxu0 %v578
        %598 = vmatmul.f32.gmra.mxu0 %v567
        %v599 = vpop.f32.mrf.mxu0
        %v600 = vadd.f32 0.0, %v599
        %601 = vmatmul.f32.gmra.mxu0 %v570
        %v602 = vpop.f32.mrf.mxu0
        %v603 = vadd.f32 0.0, %v602
        %604 = vmatmul.f32.gmra.mxu0 %v573
        %v605 = vpop.f32.mrf.mxu0
        %v606 = vadd.f32 0.0, %v605
        %607 = vmatmul.f32.gmra.mxu0 %v576
        %v608 = vpop.f32.mrf.mxu0
        %v609 = vadd.f32 0.0, %v608
        %610 = vdwg.mxu0
        %611 = vmatpush.msra.mxu0 0.0
        %612 = vmatpush.msra.mxu0 0.0
        %613 = vmatpush.msra.mxu0 0.0
        %614 = vmatpush.msra.mxu0 0.0
        %615 = vmatpush.msra.mxu0 0.0
        %616 = vmatpush.msra.mxu0 0.0
        %617 = vmatpush.msra.mxu0 0.0
        %618 = vmatpush.msra.mxu0 0.0
        %619 = vmatpush.msra.mxu0 0.0
        %620 = vmatpush.msra.mxu0 0.0
        %621 = vmatpush.msra.mxu0 0.0
        %622 = vmatpush.msra.mxu0 0.0
        %623 = vmatpush.msra.mxu0 0.0
        %624 = vmatpush.msra.mxu0 0.0
        %625 = vmatpush.msra.mxu0 0.0
        %626 = vmatpush.msra.mxu0 %v580
        %627 = vmatmul.f32.gmra.mxu0 %v567
        %v628 = vpop.f32.mrf.mxu0
        %v629 = vadd.f32 0.0, %v628
        %630 = vmatmul.f32.gmra.mxu0 %v570
        %v631 = vpop.f32.mrf.mxu0
        %v632 = vadd.f32 0.0, %v631
        %633 = vmatmul.f32.gmra.mxu0 %v573
        %v634 = vpop.f32.mrf.mxu0
        %v635 = vadd.f32 0.0, %v634
        %636 = vmatmul.f32.gmra.mxu0 %v576
        %v637 = vpop.f32.mrf.mxu0
        %v638 = vadd.f32 0.0, %v637
        %639 = vdwg.mxu0
        %v640 = vlaneseq
        %v641 = vand.u32 %v640, 127
        %v642 = vadd.s32 %v641, 128
        %vm643 = vcmp.lt.s32.totalorder %v641, 256
        %vm644 = vcmp.lt.s32.totalorder %v642, 256
        %v645 = vsel %vm643, 1, 0
        %v646 = vsel %vm644, 1, 0
        %v647 = vcvt.s32.f32 %v645
        %v648 = vcvt.s32.f32 %v646
        %v649 = vpack.c.bf16 %v648, %v647
        %v650 = vpack.c.bf16 %v483, %v418
        %v651 = vpack.c.bf16 %v486, %v421
        %v652 = vpack.c.bf16 %v489, %v424
        %v653 = vpack.c.bf16 %v492, %v427
        %654 = vst [vmem:[#allocation2] sm:$0xff] %v650
        %655 = vst [vmem:[#allocation2 + $0x8] sm:$0xff] %v651
        %656 = vst [vmem:[#allocation2 + $0x10] sm:$0xff] %v652
        %657 = vst [vmem:[#allocation2 + $0x18] sm:$0xff] %v653
        %v658 = vpack.c.bf16 %v629, %v600
        %659 = vst [vmem:[#allocation3] sm:$0xff] %v658
        %vm660 = vcmask 1042434
        %vm661 = vsmask.f32 2304
        %vm662 = vmand %vm660, %vm661
        %vm663 = vcmask 1046534
        %vm664 = vsmask.f32 6400
        %vm665 = vmand %vm663, %vm664
        %vm666 = vmor %vm665, %vm662
        %v667 = vld [vmem:[#allocation3] sm:$0x44]
        %v668 = vsel %vm666, %v649, %v667
        %669 = vst [vmem:[#allocation3] sm:$0x44] %v668
        %v670 = vpack.c.bf16 %v495, %v430
        %v671 = vpack.c.bf16 %v498, %v433
        %v672 = vpack.c.bf16 %v501, %v436
        %v673 = vpack.c.bf16 %v504, %v439
        %s674 = scalar_lea.vmem [#allocation2], 32
        %675 = vst [vmem:[%s674] sm:$0xff] %v670
        %676 = vst [vmem:[%s674 + $0x8] sm:$0xff] %v671
        %677 = vst [vmem:[%s674 + $0x10] sm:$0xff] %v672
        %678 = vst [vmem:[%s674 + $0x18] sm:$0xff] %v673
        %v679 = vpack.c.bf16 %v632, %v603
        %s680 = scalar_lea.vmem [#allocation3], 8
        %681 = vst [vmem:[%s680] sm:$0xff] %v679
        %v682 = vld [vmem:[%s680] sm:$0x44]
        %v683 = vsel %vm666, %v649, %v682
        %684 = vst [vmem:[%s680] sm:$0x44] %v683
        %v685 = vpack.c.bf16 %v507, %v442
        %v686 = vpack.c.bf16 %v510, %v445
        %v687 = vpack.c.bf16 %v513, %v448
        %v688 = vpack.c.bf16 %v516, %v451
        %s689 = scalar_lea.vmem [#allocation2], 64
        %690 = vst [vmem:[%s689] sm:$0xff] %v685
        %691 = vst [vmem:[%s689 + $0x8] sm:$0xff] %v686
        %692 = vst [vmem:[%s689 + $0x10] sm:$0xff] %v687
        %693 = vst [vmem:[%s689 + $0x18] sm:$0xff] %v688
        %v694 = vpack.c.bf16 %v635, %v606
        %s695 = scalar_lea.vmem [#allocation3], 16
        %696 = vst [vmem:[%s695] sm:$0xff] %v694
        %v697 = vld [vmem:[%s695] sm:$0x44]
        %v698 = vsel %vm666, %v649, %v697
        %699 = vst [vmem:[%s695] sm:$0x44] %v698
        %v700 = vpack.c.bf16 %v519, %v454
        %v701 = vpack.c.bf16 %v522, %v457
        %v702 = vpack.c.bf16 %v525, %v460
        %v703 = vpack.c.bf16 %v528, %v463
        %s704 = scalar_lea.vmem [#allocation2], 96
        %705 = vst [vmem:[%s704] sm:$0xff] %v700
        %706 = vst [vmem:[%s704 + $0x8] sm:$0xff] %v701
        %707 = vst [vmem:[%s704 + $0x10] sm:$0xff] %v702
        %708 = vst [vmem:[%s704 + $0x18] sm:$0xff] %v703
        %v709 = vpack.c.bf16 %v638, %v609
        %s710 = scalar_lea.vmem [#allocation3], 24
        %711 = vst [vmem:[%s710] sm:$0xff] %v709
        %v712 = vld [vmem:[%s710] sm:$0x44]
        %v713 = vsel %vm666, %v649, %v712
        %714 = vst [vmem:[%s710] sm:$0x44] %v713
      $region48: #{attention_forward.1} parent=43 // pred_fallthru
        _
      %v715 = vld [vmem:[%s294] sm:$0xf]
      %v716 = vld [vmem:[%s2] sm:$0xf]
      %717 = vxpose.xlu0.b32.start [1/16] %v716, 128
      %718 = vxpose.xlu0.b32.cont [2/16] 0.0, 128
      %719 = vxpose.xlu0.b32.cont [3/16] 0.0, 128
      %720 = vxpose.xlu0.b32.cont [4/16] 0.0, 128
      %721 = vxpose.xlu0.b32.cont [5/16] 0.0, 128
      %722 = vxpose.xlu0.b32.cont [6/16] 0.0, 128
      %723 = vxpose.xlu0.b32.cont [7/16] 0.0, 128
      %724 = vxpose.xlu0.b32.cont [8/16] 0.0, 128
      %725 = vxpose.xlu0.b32.cont [9/16] 0.0, 128
      %726 = vxpose.xlu0.b32.cont [10/16] 0.0, 128
      %727 = vxpose.xlu0.b32.cont [11/16] 0.0, 128
      %728 = vxpose.xlu0.b32.cont [12/16] 0.0, 128
      %729 = vxpose.xlu0.b32.cont [13/16] 0.0, 128
      %730 = vxpose.xlu0.b32.cont [14/16] 0.0, 128
      %731 = vxpose.xlu0.b32.cont [15/16] 0.0, 128
      %732 = vxpose.xlu0.b32.end [16/16] 0.0, 128
      %v733 = vpop.trf.xlu0
      %v734 = vpop.trf.xlu0
      %v735 = vpop.trf.xlu0
      %v736 = vpop.trf.xlu0
      %v737 = vpop.trf.xlu0
      %v738 = vpop.trf.xlu0
      %v739 = vpop.trf.xlu0
      %v740 = vpop.trf.xlu0
      %v741 = vpop.trf.xlu0
      %v742 = vpop.trf.xlu0
      %v743 = vpop.trf.xlu0
      %v744 = vpop.trf.xlu0
      %v745 = vpop.trf.xlu0
      %v746 = vpop.trf.xlu0
      %v747 = vpop.trf.xlu0
      %v748 = vpop.trf.xlu0
      %vm749 = vcmask 31744
      %v751 = vsel %vm749, %v733, 0
      %v754 = vsel %vm749, %v734, 0
      %v757 = vsel %vm749, %v735, 0
      %v760 = vsel %vm749, %v736, 0
      %v763 = vsel %vm749, %v737, 0
      %v766 = vsel %vm749, %v738, 0
      %v769 = vsel %vm749, %v739, 0
      %v772 = vsel %vm749, %v740, 0
      %v775 = vsel %vm749, %v741, 0
      %v778 = vsel %vm749, %v742, 0
      %v781 = vsel %vm749, %v743, 0
      %v784 = vsel %vm749, %v744, 0
      %v787 = vsel %vm749, %v745, 0
      %v790 = vsel %vm749, %v746, 0
      %v793 = vsel %vm749, %v747, 0
      %v796 = vsel %vm749, %v748, 0
      %vm798 = vcmask 1043456
      %v800 = vsel %vm798, %v715, 0
      %802 = vmatpush.msra.mxu0 0.0
      %803 = vmatpush.msra.mxu0 0.0
      %804 = vmatpush.msra.mxu0 0.0
      %805 = vmatpush.msra.mxu0 0.0
      %806 = vmatpush.msra.mxu0 0.0
      %807 = vmatpush.msra.mxu0 0.0
      %808 = vmatpush.msra.mxu0 0.0
      %809 = vmatpush.msra.mxu0 0.0
      %810 = vmatpush.msra.mxu0 0.0
      %811 = vmatpush.msra.mxu0 0.0
      %812 = vmatpush.msra.mxu0 0.0
      %813 = vmatpush.msra.mxu0 0.0
      %814 = vmatpush.msra.mxu0 0.0
      %815 = vmatpush.msra.mxu0 0.0
      %816 = vmatpush.msra.mxu0 0.0
      %817 = vmatpush.msra.mxu0 %v800
      %818 = vmatmul.f32.gmra.mxu0 %v751
      %v819 = vpop.f32.mrf.mxu0
      %v820 = vadd.f32 0.0, %v819
      %821 = vmatmul.f32.gmra.mxu0 %v754
      %v822 = vpop.f32.mrf.mxu0
      %v823 = vadd.f32 0.0, %v822
      %824 = vmatmul.f32.gmra.mxu0 %v757
      %v825 = vpop.f32.mrf.mxu0
      %v826 = vadd.f32 0.0, %v825
      %827 = vmatmul.f32.gmra.mxu0 %v760
      %v828 = vpop.f32.mrf.mxu0
      %v829 = vadd.f32 0.0, %v828
      %830 = vmatmul.f32.gmra.mxu0 %v763
      %v831 = vpop.f32.mrf.mxu0
      %v832 = vadd.f32 0.0, %v831
      %833 = vmatmul.f32.gmra.mxu0 %v766
      %v834 = vpop.f32.mrf.mxu0
      %v835 = vadd.f32 0.0, %v834
      %836 = vmatmul.f32.gmra.mxu0 %v769
      %v837 = vpop.f32.mrf.mxu0
      %v838 = vadd.f32 0.0, %v837
      %839 = vmatmul.f32.gmra.mxu0 %v772
      %v840 = vpop.f32.mrf.mxu0
      %v841 = vadd.f32 0.0, %v840
      %842 = vmatmul.f32.gmra.mxu0 %v775
      %v843 = vpop.f32.mrf.mxu0
      %v844 = vadd.f32 0.0, %v843
      %845 = vmatmul.f32.gmra.mxu0 %v778
      %v846 = vpop.f32.mrf.mxu0
      %v847 = vadd.f32 0.0, %v846
      %848 = vmatmul.f32.gmra.mxu0 %v781
      %v849 = vpop.f32.mrf.mxu0
      %v850 = vadd.f32 0.0, %v849
      %851 = vmatmul.f32.gmra.mxu0 %v784
      %v852 = vpop.f32.mrf.mxu0
      %v853 = vadd.f32 0.0, %v852
      %854 = vmatmul.f32.gmra.mxu0 %v787
      %v855 = vpop.f32.mrf.mxu0
      %v856 = vadd.f32 0.0, %v855
      %857 = vmatmul.f32.gmra.mxu0 %v790
      %v858 = vpop.f32.mrf.mxu0
      %v859 = vadd.f32 0.0, %v858
      %860 = vmatmul.f32.gmra.mxu0 %v793
      %v861 = vpop.f32.mrf.mxu0
      %v862 = vadd.f32 0.0, %v861
      %863 = vmatmul.f32.gmra.mxu0 %v796
      %v864 = vpop.f32.mrf.mxu0
      %v865 = vadd.f32 0.0, %v864
      %866 = vdwg.mxu0
      %v867 = vpack.c.bf16 %v820, %v820
      %v868 = vpack.c.bf16 %v823, %v823
      %v869 = vpack.c.bf16 %v826, %v826
      %v870 = vpack.c.bf16 %v829, %v829
      %v871 = vpack.c.bf16 %v832, %v832
      %v872 = vpack.c.bf16 %v835, %v835
      %v873 = vpack.c.bf16 %v838, %v838
      %v874 = vpack.c.bf16 %v841, %v841
      %v875 = vpack.c.bf16 %v844, %v844
      %v876 = vpack.c.bf16 %v847, %v847
      %v877 = vpack.c.bf16 %v850, %v850
      %v878 = vpack.c.bf16 %v853, %v853
      %v879 = vpack.c.bf16 %v856, %v856
      %v880 = vpack.c.bf16 %v859, %v859
      %v881 = vpack.c.bf16 %v862, %v862
      %v882 = vpack.c.bf16 %v865, %v865
      %v883 = vld [vmem:[#allocation2] sm:$0xff]
      %v884 = vld [vmem:[#allocation2 + $0x8] sm:$0xff]
      %v885 = vld [vmem:[#allocation2 + $0x10] sm:$0xff]
      %v886 = vld [vmem:[#allocation2 + $0x18] sm:$0xff]
      %v891 = vunpack.c.l.b16 %v867
      %v892 = vunpack.c.l.b16 %v868
      %v893 = vunpack.c.l.b16 %v869
      %v894 = vunpack.c.l.b16 %v870
      %v895 = vpack.c.b16 %v892, %v891
      %v896 = vpack.c.b16 %v894, %v893
      %899 = vxpose.xlu0.c.b16.start [1/8] %v895, 128
      %900 = vxpose.xlu0.c.b16.cont [2/8] %v896, 128
      %901 = vxpose.xlu0.c.b16.cont [3/8] 0, 128
      %902 = vxpose.xlu0.c.b16.cont [4/8] 0, 128
      %903 = vxpose.xlu0.c.b16.cont [5/8] 0, 128
      %904 = vxpose.xlu0.c.b16.cont [6/8] 0, 128
      %905 = vxpose.xlu0.c.b16.cont [7/8] 0, 128
      %906 = vxpose.xlu0.c.b16.end [8/8] 0, 128
      %v907 = vpop.trf.xlu0
      %v908 = vpop.trf.xlu0
      %v909 = vpop.trf.xlu0
      %v910 = vpop.trf.xlu0
      %v911 = vpop.trf.xlu0
      %v912 = vpop.trf.xlu0
      %v913 = vpop.trf.xlu0
      %v914 = vpop.trf.xlu0
      %v919 = vunpack.c.l.b16 %v883
      %v920 = vunpack.c.h.b16 %v883
      %v921 = vunpack.c.l.b16 %v884
      %v922 = vunpack.c.h.b16 %v884
      %v923 = vunpack.c.l.b16 %v885
      %v924 = vunpack.c.h.b16 %v885
      %v925 = vunpack.c.l.b16 %v886
      %v926 = vunpack.c.h.b16 %v886
      %v927 = vpack.c.b16 %v921, %v919
      %v928 = vpack.c.b16 %v922, %v920
      %v929 = vpack.c.b16 %v925, %v923
      %v930 = vpack.c.b16 %v926, %v924
      %vm935 = vcmask 261120
      %v937 = vsel %vm935, %v907, 0
      %v940 = vsel %vm935, %v908, 0
      %v943 = vsel %vm935, %v909, 0
      %v946 = vsel %vm935, %v910, 0
      %v949 = vsel %vm935, %v911, 0
      %v952 = vsel %vm935, %v912, 0
      %v955 = vsel %vm935, %v913, 0
      %v958 = vsel %vm935, %v914, 0
      %960 = vmatpush.bf16.msra.mxu0 0
      %961 = vmatpush.bf16.msra.mxu0 0
      %962 = vmatpush.bf16.msra.mxu0 0
      %963 = vmatpush.bf16.msra.mxu0 0
      %964 = vmatpush.bf16.msra.mxu0 0
      %965 = vmatpush.bf16.msra.mxu0 0
      %966 = vmatpush.bf16.msra.mxu0 %v929
      %967 = vmatpush.bf16.msra.mxu0 %v927
      %968 = vmatmul.bf16.gmra.mxu0 %v937
      %v969 = vpop.f32.mrf.mxu0
      %v970 = vadd.f32 0.0, %v969
      %v971 = vpop.f32.mrf.mxu0
      %v972 = vadd.f32 0.0, %v971
      %973 = vmatmul.bf16.gmra.mxu0 %v940
      %v974 = vpop.f32.mrf.mxu0
      %v975 = vadd.f32 0.0, %v974
      %v976 = vpop.f32.mrf.mxu0
      %v977 = vadd.f32 0.0, %v976
      %978 = vmatmul.bf16.gmra.mxu0 %v943
      %v979 = vpop.f32.mrf.mxu0
      %v980 = vadd.f32 0.0, %v979
      %v981 = vpop.f32.mrf.mxu0
      %v982 = vadd.f32 0.0, %v981
      %983 = vmatmul.bf16.gmra.mxu0 %v946
      %v984 = vpop.f32.mrf.mxu0
      %v985 = vadd.f32 0.0, %v984
      %v986 = vpop.f32.mrf.mxu0
      %v987 = vadd.f32 0.0, %v986
      %988 = vmatmul.bf16.gmra.mxu0 %v949
      %v989 = vpop.f32.mrf.mxu0
      %v990 = vadd.f32 0.0, %v989
      %v991 = vpop.f32.mrf.mxu0
      %v992 = vadd.f32 0.0, %v991
      %993 = vmatmul.bf16.gmra.mxu0 %v952
      %v994 = vpop.f32.mrf.mxu0
      %v995 = vadd.f32 0.0, %v994
      %v996 = vpop.f32.mrf.mxu0
      %v997 = vadd.f32 0.0, %v996
      %998 = vmatmul.bf16.gmra.mxu0 %v955
      %v999 = vpop.f32.mrf.mxu0
      %v1000 = vadd.f32 0.0, %v999
      %v1001 = vpop.f32.mrf.mxu0
      %v1002 = vadd.f32 0.0, %v1001
      %1003 = vmatmul.bf16.gmra.mxu0 %v958
      %v1004 = vpop.f32.mrf.mxu0
      %v1005 = vadd.f32 0.0, %v1004
      %v1006 = vpop.f32.mrf.mxu0
      %v1007 = vadd.f32 0.0, %v1006
      %1008 = vdwg.mxu0
      %1009 = vmatpush.bf16.msra.mxu0 0
      %1010 = vmatpush.bf16.msra.mxu0 0
      %1011 = vmatpush.bf16.msra.mxu0 0
      %1012 = vmatpush.bf16.msra.mxu0 0
      %1013 = vmatpush.bf16.msra.mxu0 0
      %1014 = vmatpush.bf16.msra.mxu0 0
      %1015 = vmatpush.bf16.msra.mxu0 %v930
      %1016 = vmatpush.bf16.msra.mxu0 %v928
      %1017 = vmatmul.bf16.gmra.mxu0 %v937
      %v1018 = vpop.f32.mrf.mxu0
      %v1019 = vadd.f32 0.0, %v1018
      %v1020 = vpop.f32.mrf.mxu0
      %v1021 = vadd.f32 0.0, %v1020
      %1022 = vmatmul.bf16.gmra.mxu0 %v940
      %v1023 = vpop.f32.mrf.mxu0
      %v1024 = vadd.f32 0.0, %v1023
      %v1025 = vpop.f32.mrf.mxu0
      %v1026 = vadd.f32 0.0, %v1025
      %1027 = vmatmul.bf16.gmra.mxu0 %v943
      %v1028 = vpop.f32.mrf.mxu0
      %v1029 = vadd.f32 0.0, %v1028
      %v1030 = vpop.f32.mrf.mxu0
      %v1031 = vadd.f32 0.0, %v1030
      %1032 = vmatmul.bf16.gmra.mxu0 %v946
      %v1033 = vpop.f32.mrf.mxu0
      %v1034 = vadd.f32 0.0, %v1033
      %v1035 = vpop.f32.mrf.mxu0
      %v1036 = vadd.f32 0.0, %v1035
      %1037 = vmatmul.bf16.gmra.mxu0 %v949
      %v1038 = vpop.f32.mrf.mxu0
      %v1039 = vadd.f32 0.0, %v1038
      %v1040 = vpop.f32.mrf.mxu0
      %v1041 = vadd.f32 0.0, %v1040
      %1042 = vmatmul.bf16.gmra.mxu0 %v952
      %v1043 = vpop.f32.mrf.mxu0
      %v1044 = vadd.f32 0.0, %v1043
      %v1045 = vpop.f32.mrf.mxu0
      %v1046 = vadd.f32 0.0, %v1045
      %1047 = vmatmul.bf16.gmra.mxu0 %v955
      %v1048 = vpop.f32.mrf.mxu0
      %v1049 = vadd.f32 0.0, %v1048
      %v1050 = vpop.f32.mrf.mxu0
      %v1051 = vadd.f32 0.0, %v1050
      %1052 = vmatmul.bf16.gmra.mxu0 %v958
      %v1053 = vpop.f32.mrf.mxu0
      %v1054 = vadd.f32 0.0, %v1053
      %v1055 = vpop.f32.mrf.mxu0
      %v1056 = vadd.f32 0.0, %v1055
      %1057 = vdwg.mxu0
      %v1058 = vmax.f32 %v970, %v1019
      %1059 = vmax.xlane.f32.xlu0 %v1058
      %v1060 = vpop.xlane.xlu0 %1059
      %v1061 = vmax.f32 %v972, %v1021
      %1062 = vmax.xlane.f32.xlu0 %v1061
      %v1063 = vpop.xlane.xlu0 %1062
      %v1064 = vmax.f32 %v975, %v1024
      %1065 = vmax.xlane.f32.xlu0 %v1064
      %v1066 = vpop.xlane.xlu0 %1065
      %v1067 = vmax.f32 %v977, %v1026
      %1068 = vmax.xlane.f32.xlu0 %v1067
      %v1069 = vpop.xlane.xlu0 %1068
      %v1070 = vmax.f32 %v980, %v1029
      %1071 = vmax.xlane.f32.xlu0 %v1070
      %v1072 = vpop.xlane.xlu0 %1071
      %v1073 = vmax.f32 %v982, %v1031
      %1074 = vmax.xlane.f32.xlu0 %v1073
      %v1075 = vpop.xlane.xlu0 %1074
      %v1076 = vmax.f32 %v985, %v1034
      %1077 = vmax.xlane.f32.xlu0 %v1076
      %v1078 = vpop.xlane.xlu0 %1077
      %v1079 = vmax.f32 %v987, %v1036
      %1080 = vmax.xlane.f32.xlu0 %v1079
      %v1081 = vpop.xlane.xlu0 %1080
      %v1082 = vmax.f32 %v990, %v1039
      %1083 = vmax.xlane.f32.xlu0 %v1082
      %v1084 = vpop.xlane.xlu0 %1083
      %v1085 = vmax.f32 %v992, %v1041
      %1086 = vmax.xlane.f32.xlu0 %v1085
      %v1087 = vpop.xlane.xlu0 %1086
      %v1088 = vmax.f32 %v995, %v1044
      %1089 = vmax.xlane.f32.xlu0 %v1088
      %v1090 = vpop.xlane.xlu0 %1089
      %v1091 = vmax.f32 %v997, %v1046
      %1092 = vmax.xlane.f32.xlu0 %v1091
      %v1093 = vpop.xlane.xlu0 %1092
      %v1094 = vmax.f32 %v1000, %v1049
      %1095 = vmax.xlane.f32.xlu0 %v1094
      %v1096 = vpop.xlane.xlu0 %1095
      %v1097 = vmax.f32 %v1002, %v1051
      %1098 = vmax.xlane.f32.xlu0 %v1097
      %v1099 = vpop.xlane.xlu0 %1098
      %v1100 = vmax.f32 %v1005, %v1054
      %1101 = vmax.xlane.f32.xlu0 %v1100
      %v1102 = vpop.xlane.xlu0 %1101
      %v1103 = vmax.f32 %v1007, %v1056
      %1104 = vmax.xlane.f32.xlu0 %v1103
      %v1105 = vpop.xlane.xlu0 %1104
      %v1106 = vsub.f32 %v970, %v1060
      %v1107 = vsub.f32 %v1019, %v1060
      %v1108 = vsub.f32 %v972, %v1063
      %v1109 = vsub.f32 %v1021, %v1063
      %v1110 = vsub.f32 %v975, %v1066
      %v1111 = vsub.f32 %v1024, %v1066
      %v1112 = vsub.f32 %v977, %v1069
      %v1113 = vsub.f32 %v1026, %v1069
      %v1114 = vsub.f32 %v980, %v1072
      %v1115 = vsub.f32 %v1029, %v1072
      %v1116 = vsub.f32 %v982, %v1075
      %v1117 = vsub.f32 %v1031, %v1075
      %v1118 = vsub.f32 %v985, %v1078
      %v1119 = vsub.f32 %v1034, %v1078
      %v1120 = vsub.f32 %v987, %v1081
      %v1121 = vsub.f32 %v1036, %v1081
      %v1122 = vsub.f32 %v990, %v1084
      %v1123 = vsub.f32 %v1039, %v1084
      %v1124 = vsub.f32 %v992, %v1087
      %v1125 = vsub.f32 %v1041, %v1087
      %v1126 = vsub.f32 %v995, %v1090
      %v1127 = vsub.f32 %v1044, %v1090
      %v1128 = vsub.f32 %v997, %v1093
      %v1129 = vsub.f32 %v1046, %v1093
      %v1130 = vsub.f32 %v1000, %v1096
      %v1131 = vsub.f32 %v1049, %v1096
      %v1132 = vsub.f32 %v1002, %v1099
      %v1133 = vsub.f32 %v1051, %v1099
      %v1134 = vsub.f32 %v1005, %v1102
      %v1135 = vsub.f32 %v1054, %v1102
      %v1136 = vsub.f32 %v1007, %v1105
      %v1137 = vsub.f32 %v1056, %v1105
      %v1138 = vpack.c.bf16 %v1108, %v1106
      %v1139 = vpack.c.bf16 %v1109, %v1107
      %v1140 = vpack.c.bf16 %v1112, %v1110
      %v1141 = vpack.c.bf16 %v1113, %v1111
      %v1142 = vpack.c.bf16 %v1116, %v1114
      %v1143 = vpack.c.bf16 %v1117, %v1115
      %v1144 = vpack.c.bf16 %v1120, %v1118
      %v1145 = vpack.c.bf16 %v1121, %v1119
      %v1146 = vpack.c.bf16 %v1124, %v1122
      %v1147 = vpack.c.bf16 %v1125, %v1123
      %v1148 = vpack.c.bf16 %v1128, %v1126
      %v1149 = vpack.c.bf16 %v1129, %v1127
      %v1150 = vpack.c.bf16 %v1132, %v1130
      %v1151 = vpack.c.bf16 %v1133, %v1131
      %v1152 = vpack.c.bf16 %v1136, %v1134
      %v1153 = vpack.c.bf16 %v1137, %v1135
      %v1154 = vunpack.c.l.bf16 %v1138
      %v1155 = vunpack.c.l.bf16 %v1139
      %v1156 = vunpack.c.h.bf16 %v1138
      %v1157 = vunpack.c.h.bf16 %v1139
      %v1158 = vunpack.c.l.bf16 %v1140
      %v1159 = vunpack.c.l.bf16 %v1141
      %v1160 = vunpack.c.h.bf16 %v1140
      %v1161 = vunpack.c.h.bf16 %v1141
      %v1162 = vunpack.c.l.bf16 %v1142
      %v1163 = vunpack.c.l.bf16 %v1143
      %v1164 = vunpack.c.h.bf16 %v1142
      %v1165 = vunpack.c.h.bf16 %v1143
      %v1166 = vunpack.c.l.bf16 %v1144
      %v1167 = vunpack.c.l.bf16 %v1145
      %v1168 = vunpack.c.h.bf16 %v1144
      %v1169 = vunpack.c.h.bf16 %v1145
      %v1170 = vunpack.c.l.bf16 %v1146
      %v1171 = vunpack.c.l.bf16 %v1147
      %v1172 = vunpack.c.h.bf16 %v1146
      %v1173 = vunpack.c.h.bf16 %v1147
      %v1174 = vunpack.c.l.bf16 %v1148
      %v1175 = vunpack.c.l.bf16 %v1149
      %v1176 = vunpack.c.h.bf16 %v1148
      %v1177 = vunpack.c.h.bf16 %v1149
      %v1178 = vunpack.c.l.bf16 %v1150
      %v1179 = vunpack.c.l.bf16 %v1151
      %v1180 = vunpack.c.h.bf16 %v1150
      %v1181 = vunpack.c.h.bf16 %v1151
      %v1182 = vunpack.c.l.bf16 %v1152
      %v1183 = vunpack.c.l.bf16 %v1153
      %v1184 = vunpack.c.h.bf16 %v1152
      %v1185 = vunpack.c.h.bf16 %v1153
      %v1186 = vmul.f32 %v1154, 1.442695
      %v1187 = vpow.pop %v1186
      %v1188 = vmul.f32 %v1155, 1.442695
      %v1189 = vpow.pop %v1188
      %v1190 = vmul.f32 %v1156, 1.442695
      %v1191 = vpow.pop %v1190
      %v1192 = vmul.f32 %v1157, 1.442695
      %v1193 = vpow.pop %v1192
      %v1194 = vmul.f32 %v1158, 1.442695
      %v1195 = vpow.pop %v1194
      %v1196 = vmul.f32 %v1159, 1.442695
      %v1197 = vpow.pop %v1196
      %v1198 = vmul.f32 %v1160, 1.442695
      %v1199 = vpow.pop %v1198
      %v1200 = vmul.f32 %v1161, 1.442695
      %v1201 = vpow.pop %v1200
      %v1202 = vmul.f32 %v1162, 1.442695
      %v1203 = vpow.pop %v1202
      %v1204 = vmul.f32 %v1163, 1.442695
      %v1205 = vpow.pop %v1204
      %v1206 = vmul.f32 %v1164, 1.442695
      %v1207 = vpow.pop %v1206
      %v1208 = vmul.f32 %v1165, 1.442695
      %v1209 = vpow.pop %v1208
      %v1210 = vmul.f32 %v1166, 1.442695
      %v1211 = vpow.pop %v1210
      %v1212 = vmul.f32 %v1167, 1.442695
      %v1213 = vpow.pop %v1212
      %v1214 = vmul.f32 %v1168, 1.442695
      %v1215 = vpow.pop %v1214
      %v1216 = vmul.f32 %v1169, 1.442695
      %v1217 = vpow.pop %v1216
      %v1218 = vmul.f32 %v1170, 1.442695
      %v1219 = vpow.pop %v1218
      %v1220 = vmul.f32 %v1171, 1.442695
      %v1221 = vpow.pop %v1220
      %v1222 = vmul.f32 %v1172, 1.442695
      %v1223 = vpow.pop %v1222
      %v1224 = vmul.f32 %v1173, 1.442695
      %v1225 = vpow.pop %v1224
      %v1226 = vmul.f32 %v1174, 1.442695
      %v1227 = vpow.pop %v1226
      %v1228 = vmul.f32 %v1175, 1.442695
      %v1229 = vpow.pop %v1228
      %v1230 = vmul.f32 %v1176, 1.442695
      %v1231 = vpow.pop %v1230
      %v1232 = vmul.f32 %v1177, 1.442695
      %v1233 = vpow.pop %v1232
      %v1234 = vmul.f32 %v1178, 1.442695
      %v1235 = vpow.pop %v1234
      %v1236 = vmul.f32 %v1179, 1.442695
      %v1237 = vpow.pop %v1236
      %v1238 = vmul.f32 %v1180, 1.442695
      %v1239 = vpow.pop %v1238
      %v1240 = vmul.f32 %v1181, 1.442695
      %v1241 = vpow.pop %v1240
      %v1242 = vmul.f32 %v1182, 1.442695
      %v1243 = vpow.pop %v1242
      %v1244 = vmul.f32 %v1183, 1.442695
      %v1245 = vpow.pop %v1244
      %v1246 = vmul.f32 %v1184, 1.442695
      %v1247 = vpow.pop %v1246
      %v1248 = vmul.f32 %v1185, 1.442695
      %v1249 = vpow.pop %v1248
      %v1250 = vpack.c.bf16 %v1191, %v1187
      %v1251 = vpack.c.bf16 %v1193, %v1189
      %v1252 = vpack.c.bf16 %v1199, %v1195
      %v1253 = vpack.c.bf16 %v1201, %v1197
      %v1254 = vpack.c.bf16 %v1207, %v1203
      %v1255 = vpack.c.bf16 %v1209, %v1205
      %v1256 = vpack.c.bf16 %v1215, %v1211
      %v1257 = vpack.c.bf16 %v1217, %v1213
      %v1258 = vpack.c.bf16 %v1223, %v1219
      %v1259 = vpack.c.bf16 %v1225, %v1221
      %v1260 = vpack.c.bf16 %v1231, %v1227
      %v1261 = vpack.c.bf16 %v1233, %v1229
      %v1262 = vpack.c.bf16 %v1239, %v1235
      %v1263 = vpack.c.bf16 %v1241, %v1237
      %v1264 = vpack.c.bf16 %v1247, %v1243
      %v1265 = vpack.c.bf16 %v1249, %v1245
      %v1266 = vld [vmem:[#allocation3] sm:$0xff]
      %v1268 = vunpack.c.l.b16 %v1266
      %v1269 = vunpack.c.h.b16 %v1266
      %v1270 = vpack.c.b16 %v1268, %v1268
      %v1271 = vpack.c.b16 %v1269, %v1269
      %1274 = vmatpush.bf16.xpose.msra.mxu0 %v1264
      %1275 = vmatpush.bf16.xpose.msra.mxu0 %v1262
      %1276 = vmatpush.bf16.xpose.msra.mxu0 %v1260
      %1277 = vmatpush.bf16.xpose.msra.mxu0 %v1258
      %1278 = vmatpush.bf16.xpose.msra.mxu0 %v1256
      %1279 = vmatpush.bf16.xpose.msra.mxu0 %v1254
      %1280 = vmatpush.bf16.xpose.msra.mxu0 %v1252
      %1281 = vmatpush.bf16.xpose.msra.mxu0 %v1250
      %1282 = vmatmul.bf16.gmra.mxu0 %v1270
      %v1283 = vpop.f32.mrf.mxu0
      %v1284 = vadd.f32 0.0, %v1283
      %v1285 = vpop.f32.mrf.mxu0
      %1286 = vdwg.mxu0
      %1287 = vmatpush.bf16.xpose.msra.mxu0 %v1265
      %1288 = vmatpush.bf16.xpose.msra.mxu0 %v1263
      %1289 = vmatpush.bf16.xpose.msra.mxu0 %v1261
      %1290 = vmatpush.bf16.xpose.msra.mxu0 %v1259
      %1291 = vmatpush.bf16.xpose.msra.mxu0 %v1257
      %1292 = vmatpush.bf16.xpose.msra.mxu0 %v1255
      %1293 = vmatpush.bf16.xpose.msra.mxu0 %v1253
      %1294 = vmatpush.bf16.xpose.msra.mxu0 %v1251
      %1295 = vmatmul.bf16.gmra.mxu0 %v1271
      %v1296 = vpop.f32.mrf.mxu0
      %v1297 = vadd.f32 %v1284, %v1296
      %v1298 = vpop.f32.mrf.mxu0
      %1299 = vdwg.mxu0
      %v1300 = vrcp.pop %v1297
      %v1301 = vperm.slane %v1300, 4
      %v1302 = vmul.f32 %v1297, %v1301
      %v1303 = vadd.f32 %v1302, 0.0
      %s1304 = scalar_lea.vmem [#allocation2], 32
      %v1305 = vld [vmem:[%s1304] sm:$0xff]
      %v1306 = vld [vmem:[%s1304 + $0x8] sm:$0xff]
      %v1307 = vld [vmem:[%s1304 + $0x10] sm:$0xff]
      %v1308 = vld [vmem:[%s1304 + $0x18] sm:$0xff]
      %v1313 = vunpack.c.l.b16 %v871
      %v1314 = vunpack.c.l.b16 %v872
      %v1315 = vunpack.c.l.b16 %v873
      %v1316 = vunpack.c.l.b16 %v874
      %v1317 = vpack.c.b16 %v1314, %v1313
      %v1318 = vpack.c.b16 %v1316, %v1315
      %1321 = vxpose.xlu0.c.b16.start [1/8] %v1317, 128
      %1322 = vxpose.xlu0.c.b16.cont [2/8] %v1318, 128
      %1323 = vxpose.xlu0.c.b16.cont [3/8] 0, 128
      %1324 = vxpose.xlu0.c.b16.cont [4/8] 0, 128
      %1325 = vxpose.xlu0.c.b16.cont [5/8] 0, 128
      %1326 = vxpose.xlu0.c.b16.cont [6/8] 0, 128
      %1327 = vxpose.xlu0.c.b16.cont [7/8] 0, 128
      %1328 = vxpose.xlu0.c.b16.end [8/8] 0, 128
      %v1329 = vpop.trf.xlu0
      %v1330 = vpop.trf.xlu0
      %v1331 = vpop.trf.xlu0
      %v1332 = vpop.trf.xlu0
      %v1333 = vpop.trf.xlu0
      %v1334 = vpop.trf.xlu0
      %v1335 = vpop.trf.xlu0
      %v1336 = vpop.trf.xlu0
      %v1341 = vunpack.c.l.b16 %v1305
      %v1342 = vunpack.c.h.b16 %v1305
      %v1343 = vunpack.c.l.b16 %v1306
      %v1344 = vunpack.c.h.b16 %v1306
      %v1345 = vunpack.c.l.b16 %v1307
      %v1346 = vunpack.c.h.b16 %v1307
      %v1347 = vunpack.c.l.b16 %v1308
      %v1348 = vunpack.c.h.b16 %v1308
      %v1349 = vpack.c.b16 %v1343, %v1341
      %v1350 = vpack.c.b16 %v1344, %v1342
      %v1351 = vpack.c.b16 %v1347, %v1345
      %v1352 = vpack.c.b16 %v1348, %v1346
      %v1358 = vsel %vm935, %v1329, 0
      %v1361 = vsel %vm935, %v1330, 0
      %v1364 = vsel %vm935, %v1331, 0
      %v1367 = vsel %vm935, %v1332, 0
      %v1370 = vsel %vm935, %v1333, 0
      %v1373 = vsel %vm935, %v1334, 0
      %v1376 = vsel %vm935, %v1335, 0
      %v1379 = vsel %vm935, %v1336, 0
      %1381 = vmatpush.bf16.msra.mxu0 0
      %1382 = vmatpush.bf16.msra.mxu0 0
      %1383 = vmatpush.bf16.msra.mxu0 0
      %1384 = vmatpush.bf16.msra.mxu0 0
      %1385 = vmatpush.bf16.msra.mxu0 0
      %1386 = vmatpush.bf16.msra.mxu0 0
      %1387 = vmatpush.bf16.msra.mxu0 %v1351
      %1388 = vmatpush.bf16.msra.mxu0 %v1349
      %1389 = vmatmul.bf16.gmra.mxu0 %v1358
      %v1390 = vpop.f32.mrf.mxu0
      %v1391 = vadd.f32 0.0, %v1390
      %v1392 = vpop.f32.mrf.mxu0
      %v1393 = vadd.f32 0.0, %v1392
      %1394 = vmatmul.bf16.gmra.mxu0 %v1361
      %v1395 = vpop.f32.mrf.mxu0
      %v1396 = vadd.f32 0.0, %v1395
      %v1397 = vpop.f32.mrf.mxu0
      %v1398 = vadd.f32 0.0, %v1397
      %1399 = vmatmul.bf16.gmra.mxu0 %v1364
      %v1400 = vpop.f32.mrf.mxu0
      %v1401 = vadd.f32 0.0, %v1400
      %v1402 = vpop.f32.mrf.mxu0
      %v1403 = vadd.f32 0.0, %v1402
      %1404 = vmatmul.bf16.gmra.mxu0 %v1367
      %v1405 = vpop.f32.mrf.mxu0
      %v1406 = vadd.f32 0.0, %v1405
      %v1407 = vpop.f32.mrf.mxu0
      %v1408 = vadd.f32 0.0, %v1407
      %1409 = vmatmul.bf16.gmra.mxu0 %v1370
      %v1410 = vpop.f32.mrf.mxu0
      %v1411 = vadd.f32 0.0, %v1410
      %v1412 = vpop.f32.mrf.mxu0
      %v1413 = vadd.f32 0.0, %v1412
      %1414 = vmatmul.bf16.gmra.mxu0 %v1373
      %v1415 = vpop.f32.mrf.mxu0
      %v1416 = vadd.f32 0.0, %v1415
      %v1417 = vpop.f32.mrf.mxu0
      %v1418 = vadd.f32 0.0, %v1417
      %1419 = vmatmul.bf16.gmra.mxu0 %v1376
      %v1420 = vpop.f32.mrf.mxu0
      %v1421 = vadd.f32 0.0, %v1420
      %v1422 = vpop.f32.mrf.mxu0
      %v1423 = vadd.f32 0.0, %v1422
      %1424 = vmatmul.bf16.gmra.mxu0 %v1379
      %v1425 = vpop.f32.mrf.mxu0
      %v1426 = vadd.f32 0.0, %v1425
      %v1427 = vpop.f32.mrf.mxu0
      %v1428 = vadd.f32 0.0, %v1427
      %1429 = vdwg.mxu0
      %1430 = vmatpush.bf16.msra.mxu0 0
      %1431 = vmatpush.bf16.msra.mxu0 0
      %1432 = vmatpush.bf16.msra.mxu0 0
      %1433 = vmatpush.bf16.msra.mxu0 0
      %1434 = vmatpush.bf16.msra.mxu0 0
      %1435 = vmatpush.bf16.msra.mxu0 0
      %1436 = vmatpush.bf16.msra.mxu0 %v1352
      %1437 = vmatpush.bf16.msra.mxu0 %v1350
      %1438 = vmatmul.bf16.gmra.mxu0 %v1358
      %v1439 = vpop.f32.mrf.mxu0
      %v1440 = vadd.f32 0.0, %v1439
      %v1441 = vpop.f32.mrf.mxu0
      %v1442 = vadd.f32 0.0, %v1441
      %1443 = vmatmul.bf16.gmra.mxu0 %v1361
      %v1444 = vpop.f32.mrf.mxu0
      %v1445 = vadd.f32 0.0, %v1444
      %v1446 = vpop.f32.mrf.mxu0
      %v1447 = vadd.f32 0.0, %v1446
      %1448 = vmatmul.bf16.gmra.mxu0 %v1364
      %v1449 = vpop.f32.mrf.mxu0
      %v1450 = vadd.f32 0.0, %v1449
      %v1451 = vpop.f32.mrf.mxu0
      %v1452 = vadd.f32 0.0, %v1451
      %1453 = vmatmul.bf16.gmra.mxu0 %v1367
      %v1454 = vpop.f32.mrf.mxu0
      %v1455 = vadd.f32 0.0, %v1454
      %v1456 = vpop.f32.mrf.mxu0
      %v1457 = vadd.f32 0.0, %v1456
      %1458 = vmatmul.bf16.gmra.mxu0 %v1370
      %v1459 = vpop.f32.mrf.mxu0
      %v1460 = vadd.f32 0.0, %v1459
      %v1461 = vpop.f32.mrf.mxu0
      %v1462 = vadd.f32 0.0, %v1461
      %1463 = vmatmul.bf16.gmra.mxu0 %v1373
      %v1464 = vpop.f32.mrf.mxu0
      %v1465 = vadd.f32 0.0, %v1464
      %v1466 = vpop.f32.mrf.mxu0
      %v1467 = vadd.f32 0.0, %v1466
      %1468 = vmatmul.bf16.gmra.mxu0 %v1376
      %v1469 = vpop.f32.mrf.mxu0
      %v1470 = vadd.f32 0.0, %v1469
      %v1471 = vpop.f32.mrf.mxu0
      %v1472 = vadd.f32 0.0, %v1471
      %1473 = vmatmul.bf16.gmra.mxu0 %v1379
      %v1474 = vpop.f32.mrf.mxu0
      %v1475 = vadd.f32 0.0, %v1474
      %v1476 = vpop.f32.mrf.mxu0
      %v1477 = vadd.f32 0.0, %v1476
      %1478 = vdwg.mxu0
      %v1479 = vmax.f32 %v1391, %v1440
      %1480 = vmax.xlane.f32.xlu0 %v1479
      %v1481 = vpop.xlane.xlu0 %1480
      %v1482 = vmax.f32 %v1393, %v1442
      %1483 = vmax.xlane.f32.xlu0 %v1482
      %v1484 = vpop.xlane.xlu0 %1483
      %v1485 = vmax.f32 %v1396, %v1445
      %1486 = vmax.xlane.f32.xlu0 %v1485
      %v1487 = vpop.xlane.xlu0 %1486
      %v1488 = vmax.f32 %v1398, %v1447
      %1489 = vmax.xlane.f32.xlu0 %v1488
      %v1490 = vpop.xlane.xlu0 %1489
      %v1491 = vmax.f32 %v1401, %v1450
      %1492 = vmax.xlane.f32.xlu0 %v1491
      %v1493 = vpop.xlane.xlu0 %1492
      %v1494 = vmax.f32 %v1403, %v1452
      %1495 = vmax.xlane.f32.xlu0 %v1494
      %v1496 = vpop.xlane.xlu0 %1495
      %v1497 = vmax.f32 %v1406, %v1455
      %1498 = vmax.xlane.f32.xlu0 %v1497
      %v1499 = vpop.xlane.xlu0 %1498
      %v1500 = vmax.f32 %v1408, %v1457
      %1501 = vmax.xlane.f32.xlu0 %v1500
      %v1502 = vpop.xlane.xlu0 %1501
      %v1503 = vmax.f32 %v1411, %v1460
      %1504 = vmax.xlane.f32.xlu0 %v1503
      %v1505 = vpop.xlane.xlu0 %1504
      %v1506 = vmax.f32 %v1413, %v1462
      %1507 = vmax.xlane.f32.xlu0 %v1506
      %v1508 = vpop.xlane.xlu0 %1507
      %v1509 = vmax.f32 %v1416, %v1465
      %1510 = vmax.xlane.f32.xlu0 %v1509
      %v1511 = vpop.xlane.xlu0 %1510
      %v1512 = vmax.f32 %v1418, %v1467
      %1513 = vmax.xlane.f32.xlu0 %v1512
      %v1514 = vpop.xlane.xlu0 %1513
      %v1515 = vmax.f32 %v1421, %v1470
      %1516 = vmax.xlane.f32.xlu0 %v1515
      %v1517 = vpop.xlane.xlu0 %1516
      %v1518 = vmax.f32 %v1423, %v1472
      %1519 = vmax.xlane.f32.xlu0 %v1518
      %v1520 = vpop.xlane.xlu0 %1519
      %v1521 = vmax.f32 %v1426, %v1475
      %1522 = vmax.xlane.f32.xlu0 %v1521
      %v1523 = vpop.xlane.xlu0 %1522
      %v1524 = vmax.f32 %v1428, %v1477
      %1525 = vmax.xlane.f32.xlu0 %v1524
      %v1526 = vpop.xlane.xlu0 %1525
      %v1527 = vsub.f32 %v1391, %v1481
      %v1528 = vsub.f32 %v1440, %v1481
      %v1529 = vsub.f32 %v1393, %v1484
      %v1530 = vsub.f32 %v1442, %v1484
      %v1531 = vsub.f32 %v1396, %v1487
      %v1532 = vsub.f32 %v1445, %v1487
      %v1533 = vsub.f32 %v1398, %v1490
      %v1534 = vsub.f32 %v1447, %v1490
      %v1535 = vsub.f32 %v1401, %v1493
      %v1536 = vsub.f32 %v1450, %v1493
      %v1537 = vsub.f32 %v1403, %v1496
      %v1538 = vsub.f32 %v1452, %v1496
      %v1539 = vsub.f32 %v1406, %v1499
      %v1540 = vsub.f32 %v1455, %v1499
      %v1541 = vsub.f32 %v1408, %v1502
      %v1542 = vsub.f32 %v1457, %v1502
      %v1543 = vsub.f32 %v1411, %v1505
      %v1544 = vsub.f32 %v1460, %v1505
      %v1545 = vsub.f32 %v1413, %v1508
      %v1546 = vsub.f32 %v1462, %v1508
      %v1547 = vsub.f32 %v1416, %v1511
      %v1548 = vsub.f32 %v1465, %v1511
      %v1549 = vsub.f32 %v1418, %v1514
      %v1550 = vsub.f32 %v1467, %v1514
      %v1551 = vsub.f32 %v1421, %v1517
      %v1552 = vsub.f32 %v1470, %v1517
      %v1553 = vsub.f32 %v1423, %v1520
      %v1554 = vsub.f32 %v1472, %v1520
      %v1555 = vsub.f32 %v1426, %v1523
      %v1556 = vsub.f32 %v1475, %v1523
      %v1557 = vsub.f32 %v1428, %v1526
      %v1558 = vsub.f32 %v1477, %v1526
      %v1559 = vpack.c.bf16 %v1529, %v1527
      %v1560 = vpack.c.bf16 %v1530, %v1528
      %v1561 = vpack.c.bf16 %v1533, %v1531
      %v1562 = vpack.c.bf16 %v1534, %v1532
      %v1563 = vpack.c.bf16 %v1537, %v1535
      %v1564 = vpack.c.bf16 %v1538, %v1536
      %v1565 = vpack.c.bf16 %v1541, %v1539
      %v1566 = vpack.c.bf16 %v1542, %v1540
      %v1567 = vpack.c.bf16 %v1545, %v1543
      %v1568 = vpack.c.bf16 %v1546, %v1544
      %v1569 = vpack.c.bf16 %v1549, %v1547
      %v1570 = vpack.c.bf16 %v1550, %v1548
      %v1571 = vpack.c.bf16 %v1553, %v1551
      %v1572 = vpack.c.bf16 %v1554, %v1552
      %v1573 = vpack.c.bf16 %v1557, %v1555
      %v1574 = vpack.c.bf16 %v1558, %v1556
      %v1575 = vunpack.c.l.bf16 %v1559
      %v1576 = vunpack.c.l.bf16 %v1560
      %v1577 = vunpack.c.h.bf16 %v1559
      %v1578 = vunpack.c.h.bf16 %v1560
      %v1579 = vunpack.c.l.bf16 %v1561
      %v1580 = vunpack.c.l.bf16 %v1562
      %v1581 = vunpack.c.h.bf16 %v1561
      %v1582 = vunpack.c.h.bf16 %v1562
      %v1583 = vunpack.c.l.bf16 %v1563
      %v1584 = vunpack.c.l.bf16 %v1564
      %v1585 = vunpack.c.h.bf16 %v1563
      %v1586 = vunpack.c.h.bf16 %v1564
      %v1587 = vunpack.c.l.bf16 %v1565
      %v1588 = vunpack.c.l.bf16 %v1566
      %v1589 = vunpack.c.h.bf16 %v1565
      %v1590 = vunpack.c.h.bf16 %v1566
      %v1591 = vunpack.c.l.bf16 %v1567
      %v1592 = vunpack.c.l.bf16 %v1568
      %v1593 = vunpack.c.h.bf16 %v1567
      %v1594 = vunpack.c.h.bf16 %v1568
      %v1595 = vunpack.c.l.bf16 %v1569
      %v1596 = vunpack.c.l.bf16 %v1570
      %v1597 = vunpack.c.h.bf16 %v1569
      %v1598 = vunpack.c.h.bf16 %v1570
      %v1599 = vunpack.c.l.bf16 %v1571
      %v1600 = vunpack.c.l.bf16 %v1572
      %v1601 = vunpack.c.h.bf16 %v1571
      %v1602 = vunpack.c.h.bf16 %v1572
      %v1603 = vunpack.c.l.bf16 %v1573
      %v1604 = vunpack.c.l.bf16 %v1574
      %v1605 = vunpack.c.h.bf16 %v1573
      %v1606 = vunpack.c.h.bf16 %v1574
      %v1607 = vmul.f32 %v1575, 1.442695
      %v1608 = vpow.pop %v1607
      %v1609 = vmul.f32 %v1576, 1.442695
      %v1610 = vpow.pop %v1609
      %v1611 = vmul.f32 %v1577, 1.442695
      %v1612 = vpow.pop %v1611
      %v1613 = vmul.f32 %v1578, 1.442695
      %v1614 = vpow.pop %v1613
      %v1615 = vmul.f32 %v1579, 1.442695
      %v1616 = vpow.pop %v1615
      %v1617 = vmul.f32 %v1580, 1.442695
      %v1618 = vpow.pop %v1617
      %v1619 = vmul.f32 %v1581, 1.442695
      %v1620 = vpow.pop %v1619
      %v1621 = vmul.f32 %v1582, 1.442695
      %v1622 = vpow.pop %v1621
      %v1623 = vmul.f32 %v1583, 1.442695
      %v1624 = vpow.pop %v1623
      %v1625 = vmul.f32 %v1584, 1.442695
      %v1626 = vpow.pop %v1625
      %v1627 = vmul.f32 %v1585, 1.442695
      %v1628 = vpow.pop %v1627
      %v1629 = vmul.f32 %v1586, 1.442695
      %v1630 = vpow.pop %v1629
      %v1631 = vmul.f32 %v1587, 1.442695
      %v1632 = vpow.pop %v1631
      %v1633 = vmul.f32 %v1588, 1.442695
      %v1634 = vpow.pop %v1633
      %v1635 = vmul.f32 %v1589, 1.442695
      %v1636 = vpow.pop %v1635
      %v1637 = vmul.f32 %v1590, 1.442695
      %v1638 = vpow.pop %v1637
      %v1639 = vmul.f32 %v1591, 1.442695
      %v1640 = vpow.pop %v1639
      %v1641 = vmul.f32 %v1592, 1.442695
      %v1642 = vpow.pop %v1641
      %v1643 = vmul.f32 %v1593, 1.442695
      %v1644 = vpow.pop %v1643
      %v1645 = vmul.f32 %v1594, 1.442695
      %v1646 = vpow.pop %v1645
      %v1647 = vmul.f32 %v1595, 1.442695
      %v1648 = vpow.pop %v1647
      %v1649 = vmul.f32 %v1596, 1.442695
      %v1650 = vpow.pop %v1649
      %v1651 = vmul.f32 %v1597, 1.442695
      %v1652 = vpow.pop %v1651
      %v1653 = vmul.f32 %v1598, 1.442695
      %v1654 = vpow.pop %v1653
      %v1655 = vmul.f32 %v1599, 1.442695
      %v1656 = vpow.pop %v1655
      %v1657 = vmul.f32 %v1600, 1.442695
      %v1658 = vpow.pop %v1657
      %v1659 = vmul.f32 %v1601, 1.442695
      %v1660 = vpow.pop %v1659
      %v1661 = vmul.f32 %v1602, 1.442695
      %v1662 = vpow.pop %v1661
      %v1663 = vmul.f32 %v1603, 1.442695
      %v1664 = vpow.pop %v1663
      %v1665 = vmul.f32 %v1604, 1.442695
      %v1666 = vpow.pop %v1665
      %v1667 = vmul.f32 %v1605, 1.442695
      %v1668 = vpow.pop %v1667
      %v1669 = vmul.f32 %v1606, 1.442695
      %v1670 = vpow.pop %v1669
      %v1671 = vpack.c.bf16 %v1612, %v1608
      %v1672 = vpack.c.bf16 %v1614, %v1610
      %v1673 = vpack.c.bf16 %v1620, %v1616
      %v1674 = vpack.c.bf16 %v1622, %v1618
      %v1675 = vpack.c.bf16 %v1628, %v1624
      %v1676 = vpack.c.bf16 %v1630, %v1626
      %v1677 = vpack.c.bf16 %v1636, %v1632
      %v1678 = vpack.c.bf16 %v1638, %v1634
      %v1679 = vpack.c.bf16 %v1644, %v1640
      %v1680 = vpack.c.bf16 %v1646, %v1642
      %v1681 = vpack.c.bf16 %v1652, %v1648
      %v1682 = vpack.c.bf16 %v1654, %v1650
      %v1683 = vpack.c.bf16 %v1660, %v1656
      %v1684 = vpack.c.bf16 %v1662, %v1658
      %v1685 = vpack.c.bf16 %v1668, %v1664
      %v1686 = vpack.c.bf16 %v1670, %v1666
      %s1687 = scalar_lea.vmem [#allocation3], 8
      %v1688 = vld [vmem:[%s1687] sm:$0xff]
      %v1690 = vunpack.c.l.b16 %v1688
      %v1691 = vunpack.c.h.b16 %v1688
      %v1692 = vpack.c.b16 %v1690, %v1690
      %v1693 = vpack.c.b16 %v1691, %v1691
      %1696 = vmatpush.bf16.xpose.msra.mxu0 %v1685
      %1697 = vmatpush.bf16.xpose.msra.mxu0 %v1683
      %1698 = vmatpush.bf16.xpose.msra.mxu0 %v1681
      %1699 = vmatpush.bf16.xpose.msra.mxu0 %v1679
      %1700 = vmatpush.bf16.xpose.msra.mxu0 %v1677
      %1701 = vmatpush.bf16.xpose.msra.mxu0 %v1675
      %1702 = vmatpush.bf16.xpose.msra.mxu0 %v1673
      %1703 = vmatpush.bf16.xpose.msra.mxu0 %v1671
      %1704 = vmatmul.bf16.gmra.mxu0 %v1692
      %v1705 = vpop.f32.mrf.mxu0
      %v1706 = vadd.f32 0.0, %v1705
      %v1707 = vpop.f32.mrf.mxu0
      %1708 = vdwg.mxu0
      %1709 = vmatpush.bf16.xpose.msra.mxu0 %v1686
      %1710 = vmatpush.bf16.xpose.msra.mxu0 %v1684
      %1711 = vmatpush.bf16.xpose.msra.mxu0 %v1682
      %1712 = vmatpush.bf16.xpose.msra.mxu0 %v1680
      %1713 = vmatpush.bf16.xpose.msra.mxu0 %v1678
      %1714 = vmatpush.bf16.xpose.msra.mxu0 %v1676
      %1715 = vmatpush.bf16.xpose.msra.mxu0 %v1674
      %1716 = vmatpush.bf16.xpose.msra.mxu0 %v1672
      %1717 = vmatmul.bf16.gmra.mxu0 %v1693
      %v1718 = vpop.f32.mrf.mxu0
      %v1719 = vadd.f32 %v1706, %v1718
      %v1720 = vpop.f32.mrf.mxu0
      %1721 = vdwg.mxu0
      %v1722 = vrcp.pop %v1719
      %v1723 = vperm.slane %v1722, 4
      %v1724 = vmul.f32 %v1719, %v1723
      %v1725 = vadd.f32 %v1303, %v1724
      %s1726 = scalar_lea.vmem [#allocation2], 64
      %v1727 = vld [vmem:[%s1726] sm:$0xff]
      %v1728 = vld [vmem:[%s1726 + $0x8] sm:$0xff]
      %v1729 = vld [vmem:[%s1726 + $0x10] sm:$0xff]
      %v1730 = vld [vmem:[%s1726 + $0x18] sm:$0xff]
      %v1735 = vunpack.c.l.b16 %v875
      %v1736 = vunpack.c.l.b16 %v876
      %v1737 = vunpack.c.l.b16 %v877
      %v1738 = vunpack.c.l.b16 %v878
      %v1739 = vpack.c.b16 %v1736, %v1735
      %v1740 = vpack.c.b16 %v1738, %v1737
      %1743 = vxpose.xlu0.c.b16.start [1/8] %v1739, 128
      %1744 = vxpose.xlu0.c.b16.cont [2/8] %v1740, 128
      %1745 = vxpose.xlu0.c.b16.cont [3/8] 0, 128
      %1746 = vxpose.xlu0.c.b16.cont [4/8] 0, 128
      %1747 = vxpose.xlu0.c.b16.cont [5/8] 0, 128
      %1748 = vxpose.xlu0.c.b16.cont [6/8] 0, 128
      %1749 = vxpose.xlu0.c.b16.cont [7/8] 0, 128
      %1750 = vxpose.xlu0.c.b16.end [8/8] 0, 128
      %v1751 = vpop.trf.xlu0
      %v1752 = vpop.trf.xlu0
      %v1753 = vpop.trf.xlu0
      %v1754 = vpop.trf.xlu0
      %v1755 = vpop.trf.xlu0
      %v1756 = vpop.trf.xlu0
      %v1757 = vpop.trf.xlu0
      %v1758 = vpop.trf.xlu0
      %v1763 = vunpack.c.l.b16 %v1727
      %v1764 = vunpack.c.h.b16 %v1727
      %v1765 = vunpack.c.l.b16 %v1728
      %v1766 = vunpack.c.h.b16 %v1728
      %v1767 = vunpack.c.l.b16 %v1729
      %v1768 = vunpack.c.h.b16 %v1729
      %v1769 = vunpack.c.l.b16 %v1730
      %v1770 = vunpack.c.h.b16 %v1730
      %v1771 = vpack.c.b16 %v1765, %v1763
      %v1772 = vpack.c.b16 %v1766, %v1764
      %v1773 = vpack.c.b16 %v1769, %v1767
      %v1774 = vpack.c.b16 %v1770, %v1768
      %v1780 = vsel %vm935, %v1751, 0
      %v1783 = vsel %vm935, %v1752, 0
      %v1786 = vsel %vm935, %v1753, 0
      %v1789 = vsel %vm935, %v1754, 0
      %v1792 = vsel %vm935, %v1755, 0
      %v1795 = vsel %vm935, %v1756, 0
      %v1798 = vsel %vm935, %v1757, 0
      %v1801 = vsel %vm935, %v1758, 0
      %1803 = vmatpush.bf16.msra.mxu0 0
      %1804 = vmatpush.bf16.msra.mxu0 0
      %1805 = vmatpush.bf16.msra.mxu0 0
      %1806 = vmatpush.bf16.msra.mxu0 0
      %1807 = vmatpush.bf16.msra.mxu0 0
      %1808 = vmatpush.bf16.msra.mxu0 0
      %1809 = vmatpush.bf16.msra.mxu0 %v1773
      %1810 = vmatpush.bf16.msra.mxu0 %v1771
      %1811 = vmatmul.bf16.gmra.mxu0 %v1780
      %v1812 = vpop.f32.mrf.mxu0
      %v1813 = vadd.f32 0.0, %v1812
      %v1814 = vpop.f32.mrf.mxu0
      %v1815 = vadd.f32 0.0, %v1814
      %1816 = vmatmul.bf16.gmra.mxu0 %v1783
      %v1817 = vpop.f32.mrf.mxu0
      %v1818 = vadd.f32 0.0, %v1817
      %v1819 = vpop.f32.mrf.mxu0
      %v1820 = vadd.f32 0.0, %v1819
      %1821 = vmatmul.bf16.gmra.mxu0 %v1786
      %v1822 = vpop.f32.mrf.mxu0
      %v1823 = vadd.f32 0.0, %v1822
      %v1824 = vpop.f32.mrf.mxu0
      %v1825 = vadd.f32 0.0, %v1824
      %1826 = vmatmul.bf16.gmra.mxu0 %v1789
      %v1827 = vpop.f32.mrf.mxu0
      %v1828 = vadd.f32 0.0, %v1827
      %v1829 = vpop.f32.mrf.mxu0
      %v1830 = vadd.f32 0.0, %v1829
      %1831 = vmatmul.bf16.gmra.mxu0 %v1792
      %v1832 = vpop.f32.mrf.mxu0
      %v1833 = vadd.f32 0.0, %v1832
      %v1834 = vpop.f32.mrf.mxu0
      %v1835 = vadd.f32 0.0, %v1834
      %1836 = vmatmul.bf16.gmra.mxu0 %v1795
      %v1837 = vpop.f32.mrf.mxu0
      %v1838 = vadd.f32 0.0, %v1837
      %v1839 = vpop.f32.mrf.mxu0
      %v1840 = vadd.f32 0.0, %v1839
      %1841 = vmatmul.bf16.gmra.mxu0 %v1798
      %v1842 = vpop.f32.mrf.mxu0
      %v1843 = vadd.f32 0.0, %v1842
      %v1844 = vpop.f32.mrf.mxu0
      %v1845 = vadd.f32 0.0, %v1844
      %1846 = vmatmul.bf16.gmra.mxu0 %v1801
      %v1847 = vpop.f32.mrf.mxu0
      %v1848 = vadd.f32 0.0, %v1847
      %v1849 = vpop.f32.mrf.mxu0
      %v1850 = vadd.f32 0.0, %v1849
      %1851 = vdwg.mxu0
      %1852 = vmatpush.bf16.msra.mxu0 0
      %1853 = vmatpush.bf16.msra.mxu0 0
      %1854 = vmatpush.bf16.msra.mxu0 0
      %1855 = vmatpush.bf16.msra.mxu0 0
      %1856 = vmatpush.bf16.msra.mxu0 0
      %1857 = vmatpush.bf16.msra.mxu0 0
      %1858 = vmatpush.bf16.msra.mxu0 %v1774
      %1859 = vmatpush.bf16.msra.mxu0 %v1772
      %1860 = vmatmul.bf16.gmra.mxu0 %v1780
      %v1861 = vpop.f32.mrf.mxu0
      %v1862 = vadd.f32 0.0, %v1861
      %v1863 = vpop.f32.mrf.mxu0
      %v1864 = vadd.f32 0.0, %v1863
      %1865 = vmatmul.bf16.gmra.mxu0 %v1783
      %v1866 = vpop.f32.mrf.mxu0
      %v1867 = vadd.f32 0.0, %v1866
      %v1868 = vpop.f32.mrf.mxu0
      %v1869 = vadd.f32 0.0, %v1868
      %1870 = vmatmul.bf16.gmra.mxu0 %v1786
      %v1871 = vpop.f32.mrf.mxu0
      %v1872 = vadd.f32 0.0, %v1871
      %v1873 = vpop.f32.mrf.mxu0
      %v1874 = vadd.f32 0.0, %v1873
      %1875 = vmatmul.bf16.gmra.mxu0 %v1789
      %v1876 = vpop.f32.mrf.mxu0
      %v1877 = vadd.f32 0.0, %v1876
      %v1878 = vpop.f32.mrf.mxu0
      %v1879 = vadd.f32 0.0, %v1878
      %1880 = vmatmul.bf16.gmra.mxu0 %v1792
      %v1881 = vpop.f32.mrf.mxu0
      %v1882 = vadd.f32 0.0, %v1881
      %v1883 = vpop.f32.mrf.mxu0
      %v1884 = vadd.f32 0.0, %v1883
      %1885 = vmatmul.bf16.gmra.mxu0 %v1795
      %v1886 = vpop.f32.mrf.mxu0
      %v1887 = vadd.f32 0.0, %v1886
      %v1888 = vpop.f32.mrf.mxu0
      %v1889 = vadd.f32 0.0, %v1888
      %1890 = vmatmul.bf16.gmra.mxu0 %v1798
      %v1891 = vpop.f32.mrf.mxu0
      %v1892 = vadd.f32 0.0, %v1891
      %v1893 = vpop.f32.mrf.mxu0
      %v1894 = vadd.f32 0.0, %v1893
      %1895 = vmatmul.bf16.gmra.mxu0 %v1801
      %v1896 = vpop.f32.mrf.mxu0
      %v1897 = vadd.f32 0.0, %v1896
      %v1898 = vpop.f32.mrf.mxu0
      %v1899 = vadd.f32 0.0, %v1898
      %1900 = vdwg.mxu0
      %v1901 = vmax.f32 %v1813, %v1862
      %1902 = vmax.xlane.f32.xlu0 %v1901
      %v1903 = vpop.xlane.xlu0 %1902
      %v1904 = vmax.f32 %v1815, %v1864
      %1905 = vmax.xlane.f32.xlu0 %v1904
      %v1906 = vpop.xlane.xlu0 %1905
      %v1907 = vmax.f32 %v1818, %v1867
      %1908 = vmax.xlane.f32.xlu0 %v1907
      %v1909 = vpop.xlane.xlu0 %1908
      %v1910 = vmax.f32 %v1820, %v1869
      %1911 = vmax.xlane.f32.xlu0 %v1910
      %v1912 = vpop.xlane.xlu0 %1911
      %v1913 = vmax.f32 %v1823, %v1872
      %1914 = vmax.xlane.f32.xlu0 %v1913
      %v1915 = vpop.xlane.xlu0 %1914
      %v1916 = vmax.f32 %v1825, %v1874
      %1917 = vmax.xlane.f32.xlu0 %v1916
      %v1918 = vpop.xlane.xlu0 %1917
      %v1919 = vmax.f32 %v1828, %v1877
      %1920 = vmax.xlane.f32.xlu0 %v1919
      %v1921 = vpop.xlane.xlu0 %1920
      %v1922 = vmax.f32 %v1830, %v1879
      %1923 = vmax.xlane.f32.xlu0 %v1922
      %v1924 = vpop.xlane.xlu0 %1923
      %v1925 = vmax.f32 %v1833, %v1882
      %1926 = vmax.xlane.f32.xlu0 %v1925
      %v1927 = vpop.xlane.xlu0 %1926
      %v1928 = vmax.f32 %v1835, %v1884
      %1929 = vmax.xlane.f32.xlu0 %v1928
      %v1930 = vpop.xlane.xlu0 %1929
      %v1931 = vmax.f32 %v1838, %v1887
      %1932 = vmax.xlane.f32.xlu0 %v1931
      %v1933 = vpop.xlane.xlu0 %1932
      %v1934 = vmax.f32 %v1840, %v1889
      %1935 = vmax.xlane.f32.xlu0 %v1934
      %v1936 = vpop.xlane.xlu0 %1935
      %v1937 = vmax.f32 %v1843, %v1892
      %1938 = vmax.xlane.f32.xlu0 %v1937
      %v1939 = vpop.xlane.xlu0 %1938
      %v1940 = vmax.f32 %v1845, %v1894
      %1941 = vmax.xlane.f32.xlu0 %v1940
      %v1942 = vpop.xlane.xlu0 %1941
      %v1943 = vmax.f32 %v1848, %v1897
      %1944 = vmax.xlane.f32.xlu0 %v1943
      %v1945 = vpop.xlane.xlu0 %1944
      %v1946 = vmax.f32 %v1850, %v1899
      %1947 = vmax.xlane.f32.xlu0 %v1946
      %v1948 = vpop.xlane.xlu0 %1947
      %v1949 = vsub.f32 %v1813, %v1903
      %v1950 = vsub.f32 %v1862, %v1903
      %v1951 = vsub.f32 %v1815, %v1906
      %v1952 = vsub.f32 %v1864, %v1906
      %v1953 = vsub.f32 %v1818, %v1909
      %v1954 = vsub.f32 %v1867, %v1909
      %v1955 = vsub.f32 %v1820, %v1912
      %v1956 = vsub.f32 %v1869, %v1912
      %v1957 = vsub.f32 %v1823, %v1915
      %v1958 = vsub.f32 %v1872, %v1915
      %v1959 = vsub.f32 %v1825, %v1918
      %v1960 = vsub.f32 %v1874, %v1918
      %v1961 = vsub.f32 %v1828, %v1921
      %v1962 = vsub.f32 %v1877, %v1921
      %v1963 = vsub.f32 %v1830, %v1924
      %v1964 = vsub.f32 %v1879, %v1924
      %v1965 = vsub.f32 %v1833, %v1927
      %v1966 = vsub.f32 %v1882, %v1927
      %v1967 = vsub.f32 %v1835, %v1930
      %v1968 = vsub.f32 %v1884, %v1930
      %v1969 = vsub.f32 %v1838, %v1933
      %v1970 = vsub.f32 %v1887, %v1933
      %v1971 = vsub.f32 %v1840, %v1936
      %v1972 = vsub.f32 %v1889, %v1936
      %v1973 = vsub.f32 %v1843, %v1939
      %v1974 = vsub.f32 %v1892, %v1939
      %v1975 = vsub.f32 %v1845, %v1942
      %v1976 = vsub.f32 %v1894, %v1942
      %v1977 = vsub.f32 %v1848, %v1945
      %v1978 = vsub.f32 %v1897, %v1945
      %v1979 = vsub.f32 %v1850, %v1948
      %v1980 = vsub.f32 %v1899, %v1948
      %v1981 = vpack.c.bf16 %v1951, %v1949
      %v1982 = vpack.c.bf16 %v1952, %v1950
      %v1983 = vpack.c.bf16 %v1955, %v1953
      %v1984 = vpack.c.bf16 %v1956, %v1954
      %v1985 = vpack.c.bf16 %v1959, %v1957
      %v1986 = vpack.c.bf16 %v1960, %v1958
      %v1987 = vpack.c.bf16 %v1963, %v1961
      %v1988 = vpack.c.bf16 %v1964, %v1962
      %v1989 = vpack.c.bf16 %v1967, %v1965
      %v1990 = vpack.c.bf16 %v1968, %v1966
      %v1991 = vpack.c.bf16 %v1971, %v1969
      %v1992 = vpack.c.bf16 %v1972, %v1970
      %v1993 = vpack.c.bf16 %v1975, %v1973
      %v1994 = vpack.c.bf16 %v1976, %v1974
      %v1995 = vpack.c.bf16 %v1979, %v1977
      %v1996 = vpack.c.bf16 %v1980, %v1978
      %v1997 = vunpack.c.l.bf16 %v1981
      %v1998 = vunpack.c.l.bf16 %v1982
      %v1999 = vunpack.c.h.bf16 %v1981
      %v2000 = vunpack.c.h.bf16 %v1982
      %v2001 = vunpack.c.l.bf16 %v1983
      %v2002 = vunpack.c.l.bf16 %v1984
      %v2003 = vunpack.c.h.bf16 %v1983
      %v2004 = vunpack.c.h.bf16 %v1984
      %v2005 = vunpack.c.l.bf16 %v1985
      %v2006 = vunpack.c.l.bf16 %v1986
      %v2007 = vunpack.c.h.bf16 %v1985
      %v2008 = vunpack.c.h.bf16 %v1986
      %v2009 = vunpack.c.l.bf16 %v1987
      %v2010 = vunpack.c.l.bf16 %v1988
      %v2011 = vunpack.c.h.bf16 %v1987
      %v2012 = vunpack.c.h.bf16 %v1988
      %v2013 = vunpack.c.l.bf16 %v1989
      %v2014 = vunpack.c.l.bf16 %v1990
      %v2015 = vunpack.c.h.bf16 %v1989
      %v2016 = vunpack.c.h.bf16 %v1990
      %v2017 = vunpack.c.l.bf16 %v1991
      %v2018 = vunpack.c.l.bf16 %v1992
      %v2019 = vunpack.c.h.bf16 %v1991
      %v2020 = vunpack.c.h.bf16 %v1992
      %v2021 = vunpack.c.l.bf16 %v1993
      %v2022 = vunpack.c.l.bf16 %v1994
      %v2023 = vunpack.c.h.bf16 %v1993
      %v2024 = vunpack.c.h.bf16 %v1994
      %v2025 = vunpack.c.l.bf16 %v1995
      %v2026 = vunpack.c.l.bf16 %v1996
      %v2027 = vunpack.c.h.bf16 %v1995
      %v2028 = vunpack.c.h.bf16 %v1996
      %v2029 = vmul.f32 %v1997, 1.442695
      %v2030 = vpow.pop %v2029
      %v2031 = vmul.f32 %v1998, 1.442695
      %v2032 = vpow.pop %v2031
      %v2033 = vmul.f32 %v1999, 1.442695
      %v2034 = vpow.pop %v2033
      %v2035 = vmul.f32 %v2000, 1.442695
      %v2036 = vpow.pop %v2035
      %v2037 = vmul.f32 %v2001, 1.442695
      %v2038 = vpow.pop %v2037
      %v2039 = vmul.f32 %v2002, 1.442695
      %v2040 = vpow.pop %v2039
      %v2041 = vmul.f32 %v2003, 1.442695
      %v2042 = vpow.pop %v2041
      %v2043 = vmul.f32 %v2004, 1.442695
      %v2044 = vpow.pop %v2043
      %v2045 = vmul.f32 %v2005, 1.442695
      %v2046 = vpow.pop %v2045
      %v2047 = vmul.f32 %v2006, 1.442695
      %v2048 = vpow.pop %v2047
      %v2049 = vmul.f32 %v2007, 1.442695
      %v2050 = vpow.pop %v2049
      %v2051 = vmul.f32 %v2008, 1.442695
      %v2052 = vpow.pop %v2051
      %v2053 = vmul.f32 %v2009, 1.442695
      %v2054 = vpow.pop %v2053
      %v2055 = vmul.f32 %v2010, 1.442695
      %v2056 = vpow.pop %v2055
      %v2057 = vmul.f32 %v2011, 1.442695
      %v2058 = vpow.pop %v2057
      %v2059 = vmul.f32 %v2012, 1.442695
      %v2060 = vpow.pop %v2059
      %v2061 = vmul.f32 %v2013, 1.442695
      %v2062 = vpow.pop %v2061
      %v2063 = vmul.f32 %v2014, 1.442695
      %v2064 = vpow.pop %v2063
      %v2065 = vmul.f32 %v2015, 1.442695
      %v2066 = vpow.pop %v2065
      %v2067 = vmul.f32 %v2016, 1.442695
      %v2068 = vpow.pop %v2067
      %v2069 = vmul.f32 %v2017, 1.442695
      %v2070 = vpow.pop %v2069
      %v2071 = vmul.f32 %v2018, 1.442695
      %v2072 = vpow.pop %v2071
      %v2073 = vmul.f32 %v2019, 1.442695
      %v2074 = vpow.pop %v2073
      %v2075 = vmul.f32 %v2020, 1.442695
      %v2076 = vpow.pop %v2075
      %v2077 = vmul.f32 %v2021, 1.442695
      %v2078 = vpow.pop %v2077
      %v2079 = vmul.f32 %v2022, 1.442695
      %v2080 = vpow.pop %v2079
      %v2081 = vmul.f32 %v2023, 1.442695
      %v2082 = vpow.pop %v2081
      %v2083 = vmul.f32 %v2024, 1.442695
      %v2084 = vpow.pop %v2083
      %v2085 = vmul.f32 %v2025, 1.442695
      %v2086 = vpow.pop %v2085
      %v2087 = vmul.f32 %v2026, 1.442695
      %v2088 = vpow.pop %v2087
      %v2089 = vmul.f32 %v2027, 1.442695
      %v2090 = vpow.pop %v2089
      %v2091 = vmul.f32 %v2028, 1.442695
      %v2092 = vpow.pop %v2091
      %v2093 = vpack.c.bf16 %v2034, %v2030
      %v2094 = vpack.c.bf16 %v2036, %v2032
      %v2095 = vpack.c.bf16 %v2042, %v2038
      %v2096 = vpack.c.bf16 %v2044, %v2040
      %v2097 = vpack.c.bf16 %v2050, %v2046
      %v2098 = vpack.c.bf16 %v2052, %v2048
      %v2099 = vpack.c.bf16 %v2058, %v2054
      %v2100 = vpack.c.bf16 %v2060, %v2056
      %v2101 = vpack.c.bf16 %v2066, %v2062
      %v2102 = vpack.c.bf16 %v2068, %v2064
      %v2103 = vpack.c.bf16 %v2074, %v2070
      %v2104 = vpack.c.bf16 %v2076, %v2072
      %v2105 = vpack.c.bf16 %v2082, %v2078
      %v2106 = vpack.c.bf16 %v2084, %v2080
      %v2107 = vpack.c.bf16 %v2090, %v2086
      %v2108 = vpack.c.bf16 %v2092, %v2088
      %s2109 = scalar_lea.vmem [#allocation3], 16
      %v2110 = vld [vmem:[%s2109] sm:$0xff]
      %v2112 = vunpack.c.l.b16 %v2110
      %v2113 = vunpack.c.h.b16 %v2110
      %v2114 = vpack.c.b16 %v2112, %v2112
      %v2115 = vpack.c.b16 %v2113, %v2113
      %2118 = vmatpush.bf16.xpose.msra.mxu0 %v2107
      %2119 = vmatpush.bf16.xpose.msra.mxu0 %v2105
      %2120 = vmatpush.bf16.xpose.msra.mxu0 %v2103
      %2121 = vmatpush.bf16.xpose.msra.mxu0 %v2101
      %2122 = vmatpush.bf16.xpose.msra.mxu0 %v2099
      %2123 = vmatpush.bf16.xpose.msra.mxu0 %v2097
      %2124 = vmatpush.bf16.xpose.msra.mxu0 %v2095
      %2125 = vmatpush.bf16.xpose.msra.mxu0 %v2093
      %2126 = vmatmul.bf16.gmra.mxu0 %v2114
      %v2127 = vpop.f32.mrf.mxu0
      %v2128 = vadd.f32 0.0, %v2127
      %v2129 = vpop.f32.mrf.mxu0
      %2130 = vdwg.mxu0
      %2131 = vmatpush.bf16.xpose.msra.mxu0 %v2108
      %2132 = vmatpush.bf16.xpose.msra.mxu0 %v2106
      %2133 = vmatpush.bf16.xpose.msra.mxu0 %v2104
      %2134 = vmatpush.bf16.xpose.msra.mxu0 %v2102
      %2135 = vmatpush.bf16.xpose.msra.mxu0 %v2100
      %2136 = vmatpush.bf16.xpose.msra.mxu0 %v2098
      %2137 = vmatpush.bf16.xpose.msra.mxu0 %v2096
      %2138 = vmatpush.bf16.xpose.msra.mxu0 %v2094
      %2139 = vmatmul.bf16.gmra.mxu0 %v2115
      %v2140 = vpop.f32.mrf.mxu0
      %v2141 = vadd.f32 %v2128, %v2140
      %v2142 = vpop.f32.mrf.mxu0
      %2143 = vdwg.mxu0
      %v2144 = vrcp.pop %v2141
      %v2145 = vperm.slane %v2144, 4
      %v2146 = vmul.f32 %v2141, %v2145
      %v2147 = vadd.f32 %v1725, %v2146
      %s2148 = scalar_lea.vmem [#allocation2], 96
      %v2149 = vld [vmem:[%s2148] sm:$0xff]
      %v2150 = vld [vmem:[%s2148 + $0x8] sm:$0xff]
      %v2151 = vld [vmem:[%s2148 + $0x10] sm:$0xff]
      %v2152 = vld [vmem:[%s2148 + $0x18] sm:$0xff]
      %v2157 = vunpack.c.l.b16 %v879
      %v2158 = vunpack.c.l.b16 %v880
      %v2159 = vunpack.c.l.b16 %v881
      %v2160 = vunpack.c.l.b16 %v882
      %v2161 = vpack.c.b16 %v2158, %v2157
      %v2162 = vpack.c.b16 %v2160, %v2159
      %2165 = vxpose.xlu0.c.b16.start [1/8] %v2161, 128
      %2166 = vxpose.xlu0.c.b16.cont [2/8] %v2162, 128
      %2167 = vxpose.xlu0.c.b16.cont [3/8] 0, 128
      %2168 = vxpose.xlu0.c.b16.cont [4/8] 0, 128
      %2169 = vxpose.xlu0.c.b16.cont [5/8] 0, 128
      %2170 = vxpose.xlu0.c.b16.cont [6/8] 0, 128
      %2171 = vxpose.xlu0.c.b16.cont [7/8] 0, 128
      %2172 = vxpose.xlu0.c.b16.end [8/8] 0, 128
      %v2173 = vpop.trf.xlu0
      %v2174 = vpop.trf.xlu0
      %v2175 = vpop.trf.xlu0
      %v2176 = vpop.trf.xlu0
      %v2177 = vpop.trf.xlu0
      %v2178 = vpop.trf.xlu0
      %v2179 = vpop.trf.xlu0
      %v2180 = vpop.trf.xlu0
      %v2185 = vunpack.c.l.b16 %v2149
      %v2186 = vunpack.c.h.b16 %v2149
      %v2187 = vunpack.c.l.b16 %v2150
      %v2188 = vunpack.c.h.b16 %v2150
      %v2189 = vunpack.c.l.b16 %v2151
      %v2190 = vunpack.c.h.b16 %v2151
      %v2191 = vunpack.c.l.b16 %v2152
      %v2192 = vunpack.c.h.b16 %v2152
      %v2193 = vpack.c.b16 %v2187, %v2185
      %v2194 = vpack.c.b16 %v2188, %v2186
      %v2195 = vpack.c.b16 %v2191, %v2189
      %v2196 = vpack.c.b16 %v2192, %v2190
      %v2202 = vsel %vm935, %v2173, 0
      %v2205 = vsel %vm935, %v2174, 0
      %v2208 = vsel %vm935, %v2175, 0
      %v2211 = vsel %vm935, %v2176, 0
      %v2214 = vsel %vm935, %v2177, 0
      %v2217 = vsel %vm935, %v2178, 0
      %v2220 = vsel %vm935, %v2179, 0
      %v2223 = vsel %vm935, %v2180, 0
      %2225 = vmatpush.bf16.msra.mxu0 0
      %2226 = vmatpush.bf16.msra.mxu0 0
      %2227 = vmatpush.bf16.msra.mxu0 0
      %2228 = vmatpush.bf16.msra.mxu0 0
      %2229 = vmatpush.bf16.msra.mxu0 0
      %2230 = vmatpush.bf16.msra.mxu0 0
      %2231 = vmatpush.bf16.msra.mxu0 %v2195
      %2232 = vmatpush.bf16.msra.mxu0 %v2193
      %2233 = vmatmul.bf16.gmra.mxu0 %v2202
      %v2234 = vpop.f32.mrf.mxu0
      %v2235 = vadd.f32 0.0, %v2234
      %v2236 = vpop.f32.mrf.mxu0
      %v2237 = vadd.f32 0.0, %v2236
      %2238 = vmatmul.bf16.gmra.mxu0 %v2205
      %v2239 = vpop.f32.mrf.mxu0
      %v2240 = vadd.f32 0.0, %v2239
      %v2241 = vpop.f32.mrf.mxu0
      %v2242 = vadd.f32 0.0, %v2241
      %2243 = vmatmul.bf16.gmra.mxu0 %v2208
      %v2244 = vpop.f32.mrf.mxu0
      %v2245 = vadd.f32 0.0, %v2244
      %v2246 = vpop.f32.mrf.mxu0
      %v2247 = vadd.f32 0.0, %v2246
      %2248 = vmatmul.bf16.gmra.mxu0 %v2211
      %v2249 = vpop.f32.mrf.mxu0
      %v2250 = vadd.f32 0.0, %v2249
      %v2251 = vpop.f32.mrf.mxu0
      %v2252 = vadd.f32 0.0, %v2251
      %2253 = vmatmul.bf16.gmra.mxu0 %v2214
      %v2254 = vpop.f32.mrf.mxu0
      %v2255 = vadd.f32 0.0, %v2254
      %v2256 = vpop.f32.mrf.mxu0
      %v2257 = vadd.f32 0.0, %v2256
      %2258 = vmatmul.bf16.gmra.mxu0 %v2217
      %v2259 = vpop.f32.mrf.mxu0
      %v2260 = vadd.f32 0.0, %v2259
      %v2261 = vpop.f32.mrf.mxu0
      %v2262 = vadd.f32 0.0, %v2261
      %2263 = vmatmul.bf16.gmra.mxu0 %v2220
      %v2264 = vpop.f32.mrf.mxu0
      %v2265 = vadd.f32 0.0, %v2264
      %v2266 = vpop.f32.mrf.mxu0
      %v2267 = vadd.f32 0.0, %v2266
      %2268 = vmatmul.bf16.gmra.mxu0 %v2223
      %v2269 = vpop.f32.mrf.mxu0
      %v2270 = vadd.f32 0.0, %v2269
      %v2271 = vpop.f32.mrf.mxu0
      %v2272 = vadd.f32 0.0, %v2271
      %2273 = vdwg.mxu0
      %2274 = vmatpush.bf16.msra.mxu0 0
      %2275 = vmatpush.bf16.msra.mxu0 0
      %2276 = vmatpush.bf16.msra.mxu0 0
      %2277 = vmatpush.bf16.msra.mxu0 0
      %2278 = vmatpush.bf16.msra.mxu0 0
      %2279 = vmatpush.bf16.msra.mxu0 0
      %2280 = vmatpush.bf16.msra.mxu0 %v2196
      %2281 = vmatpush.bf16.msra.mxu0 %v2194
      %2282 = vmatmul.bf16.gmra.mxu0 %v2202
      %v2283 = vpop.f32.mrf.mxu0
      %v2284 = vadd.f32 0.0, %v2283
      %v2285 = vpop.f32.mrf.mxu0
      %v2286 = vadd.f32 0.0, %v2285
      %2287 = vmatmul.bf16.gmra.mxu0 %v2205
      %v2288 = vpop.f32.mrf.mxu0
      %v2289 = vadd.f32 0.0, %v2288
      %v2290 = vpop.f32.mrf.mxu0
      %v2291 = vadd.f32 0.0, %v2290
      %2292 = vmatmul.bf16.gmra.mxu0 %v2208
      %v2293 = vpop.f32.mrf.mxu0
      %v2294 = vadd.f32 0.0, %v2293
      %v2295 = vpop.f32.mrf.mxu0
      %v2296 = vadd.f32 0.0, %v2295
      %2297 = vmatmul.bf16.gmra.mxu0 %v2211
      %v2298 = vpop.f32.mrf.mxu0
      %v2299 = vadd.f32 0.0, %v2298
      %v2300 = vpop.f32.mrf.mxu0
      %v2301 = vadd.f32 0.0, %v2300
      %2302 = vmatmul.bf16.gmra.mxu0 %v2214
      %v2303 = vpop.f32.mrf.mxu0
      %v2304 = vadd.f32 0.0, %v2303
      %v2305 = vpop.f32.mrf.mxu0
      %v2306 = vadd.f32 0.0, %v2305
      %2307 = vmatmul.bf16.gmra.mxu0 %v2217
      %v2308 = vpop.f32.mrf.mxu0
      %v2309 = vadd.f32 0.0, %v2308
      %v2310 = vpop.f32.mrf.mxu0
      %v2311 = vadd.f32 0.0, %v2310
      %2312 = vmatmul.bf16.gmra.mxu0 %v2220
      %v2313 = vpop.f32.mrf.mxu0
      %v2314 = vadd.f32 0.0, %v2313
      %v2315 = vpop.f32.mrf.mxu0
      %v2316 = vadd.f32 0.0, %v2315
      %2317 = vmatmul.bf16.gmra.mxu0 %v2223
      %v2318 = vpop.f32.mrf.mxu0
      %v2319 = vadd.f32 0.0, %v2318
      %v2320 = vpop.f32.mrf.mxu0
      %v2321 = vadd.f32 0.0, %v2320
      %2322 = vdwg.mxu0
      %v2323 = vmax.f32 %v2235, %v2284
      %2324 = vmax.xlane.f32.xlu0 %v2323
      %v2325 = vpop.xlane.xlu0 %2324
      %v2326 = vmax.f32 %v2237, %v2286
      %2327 = vmax.xlane.f32.xlu0 %v2326
      %v2328 = vpop.xlane.xlu0 %2327
      %v2329 = vmax.f32 %v2240, %v2289
      %2330 = vmax.xlane.f32.xlu0 %v2329
      %v2331 = vpop.xlane.xlu0 %2330
      %v2332 = vmax.f32 %v2242, %v2291
      %2333 = vmax.xlane.f32.xlu0 %v2332
      %v2334 = vpop.xlane.xlu0 %2333
      %v2335 = vmax.f32 %v2245, %v2294
      %2336 = vmax.xlane.f32.xlu0 %v2335
      %v2337 = vpop.xlane.xlu0 %2336
      %v2338 = vmax.f32 %v2247, %v2296
      %2339 = vmax.xlane.f32.xlu0 %v2338
      %v2340 = vpop.xlane.xlu0 %2339
      %v2341 = vmax.f32 %v2250, %v2299
      %2342 = vmax.xlane.f32.xlu0 %v2341
      %v2343 = vpop.xlane.xlu0 %2342
      %v2344 = vmax.f32 %v2252, %v2301
      %2345 = vmax.xlane.f32.xlu0 %v2344
      %v2346 = vpop.xlane.xlu0 %2345
      %v2347 = vmax.f32 %v2255, %v2304
      %2348 = vmax.xlane.f32.xlu0 %v2347
      %v2349 = vpop.xlane.xlu0 %2348
      %v2350 = vmax.f32 %v2257, %v2306
      %2351 = vmax.xlane.f32.xlu0 %v2350
      %v2352 = vpop.xlane.xlu0 %2351
      %v2353 = vmax.f32 %v2260, %v2309
      %2354 = vmax.xlane.f32.xlu0 %v2353
      %v2355 = vpop.xlane.xlu0 %2354
      %v2356 = vmax.f32 %v2262, %v2311
      %2357 = vmax.xlane.f32.xlu0 %v2356
      %v2358 = vpop.xlane.xlu0 %2357
      %v2359 = vmax.f32 %v2265, %v2314
      %2360 = vmax.xlane.f32.xlu0 %v2359
      %v2361 = vpop.xlane.xlu0 %2360
      %v2362 = vmax.f32 %v2267, %v2316
      %2363 = vmax.xlane.f32.xlu0 %v2362
      %v2364 = vpop.xlane.xlu0 %2363
      %v2365 = vmax.f32 %v2270, %v2319
      %2366 = vmax.xlane.f32.xlu0 %v2365
      %v2367 = vpop.xlane.xlu0 %2366
      %v2368 = vmax.f32 %v2272, %v2321
      %2369 = vmax.xlane.f32.xlu0 %v2368
      %v2370 = vpop.xlane.xlu0 %2369
      %v2371 = vsub.f32 %v2235, %v2325
      %v2372 = vsub.f32 %v2284, %v2325
      %v2373 = vsub.f32 %v2237, %v2328
      %v2374 = vsub.f32 %v2286, %v2328
      %v2375 = vsub.f32 %v2240, %v2331
      %v2376 = vsub.f32 %v2289, %v2331
      %v2377 = vsub.f32 %v2242, %v2334
      %v2378 = vsub.f32 %v2291, %v2334
      %v2379 = vsub.f32 %v2245, %v2337
      %v2380 = vsub.f32 %v2294, %v2337
      %v2381 = vsub.f32 %v2247, %v2340
      %v2382 = vsub.f32 %v2296, %v2340
      %v2383 = vsub.f32 %v2250, %v2343
      %v2384 = vsub.f32 %v2299, %v2343
      %v2385 = vsub.f32 %v2252, %v2346
      %v2386 = vsub.f32 %v2301, %v2346
      %v2387 = vsub.f32 %v2255, %v2349
      %v2388 = vsub.f32 %v2304, %v2349
      %v2389 = vsub.f32 %v2257, %v2352
      %v2390 = vsub.f32 %v2306, %v2352
      %v2391 = vsub.f32 %v2260, %v2355
      %v2392 = vsub.f32 %v2309, %v2355
      %v2393 = vsub.f32 %v2262, %v2358
      %v2394 = vsub.f32 %v2311, %v2358
      %v2395 = vsub.f32 %v2265, %v2361
      %v2396 = vsub.f32 %v2314, %v2361
      %v2397 = vsub.f32 %v2267, %v2364
      %v2398 = vsub.f32 %v2316, %v2364
      %v2399 = vsub.f32 %v2270, %v2367
      %v2400 = vsub.f32 %v2319, %v2367
      %v2401 = vsub.f32 %v2272, %v2370
      %v2402 = vsub.f32 %v2321, %v2370
      %v2403 = vpack.c.bf16 %v2373, %v2371
      %v2404 = vpack.c.bf16 %v2374, %v2372
      %v2405 = vpack.c.bf16 %v2377, %v2375
      %v2406 = vpack.c.bf16 %v2378, %v2376
      %v2407 = vpack.c.bf16 %v2381, %v2379
      %v2408 = vpack.c.bf16 %v2382, %v2380
      %v2409 = vpack.c.bf16 %v2385, %v2383
      %v2410 = vpack.c.bf16 %v2386, %v2384
      %v2411 = vpack.c.bf16 %v2389, %v2387
      %v2412 = vpack.c.bf16 %v2390, %v2388
      %v2413 = vpack.c.bf16 %v2393, %v2391
      %v2414 = vpack.c.bf16 %v2394, %v2392
      %v2415 = vpack.c.bf16 %v2397, %v2395
      %v2416 = vpack.c.bf16 %v2398, %v2396
      %v2417 = vpack.c.bf16 %v2401, %v2399
      %v2418 = vpack.c.bf16 %v2402, %v2400
      %v2419 = vunpack.c.l.bf16 %v2403
      %v2420 = vunpack.c.l.bf16 %v2404
      %v2421 = vunpack.c.h.bf16 %v2403
      %v2422 = vunpack.c.h.bf16 %v2404
      %v2423 = vunpack.c.l.bf16 %v2405
      %v2424 = vunpack.c.l.bf16 %v2406
      %v2425 = vunpack.c.h.bf16 %v2405
      %v2426 = vunpack.c.h.bf16 %v2406
      %v2427 = vunpack.c.l.bf16 %v2407
      %v2428 = vunpack.c.l.bf16 %v2408
      %v2429 = vunpack.c.h.bf16 %v2407
      %v2430 = vunpack.c.h.bf16 %v2408
      %v2431 = vunpack.c.l.bf16 %v2409
      %v2432 = vunpack.c.l.bf16 %v2410
      %v2433 = vunpack.c.h.bf16 %v2409
      %v2434 = vunpack.c.h.bf16 %v2410
      %v2435 = vunpack.c.l.bf16 %v2411
      %v2436 = vunpack.c.l.bf16 %v2412
      %v2437 = vunpack.c.h.bf16 %v2411
      %v2438 = vunpack.c.h.bf16 %v2412
      %v2439 = vunpack.c.l.bf16 %v2413
      %v2440 = vunpack.c.l.bf16 %v2414
      %v2441 = vunpack.c.h.bf16 %v2413
      %v2442 = vunpack.c.h.bf16 %v2414
      %v2443 = vunpack.c.l.bf16 %v2415
      %v2444 = vunpack.c.l.bf16 %v2416
      %v2445 = vunpack.c.h.bf16 %v2415
      %v2446 = vunpack.c.h.bf16 %v2416
      %v2447 = vunpack.c.l.bf16 %v2417
      %v2448 = vunpack.c.l.bf16 %v2418
      %v2449 = vunpack.c.h.bf16 %v2417
      %v2450 = vunpack.c.h.bf16 %v2418
      %v2451 = vmul.f32 %v2419, 1.442695
      %v2452 = vpow.pop %v2451
      %v2453 = vmul.f32 %v2420, 1.442695
      %v2454 = vpow.pop %v2453
      %v2455 = vmul.f32 %v2421, 1.442695
      %v2456 = vpow.pop %v2455
      %v2457 = vmul.f32 %v2422, 1.442695
      %v2458 = vpow.pop %v2457
      %v2459 = vmul.f32 %v2423, 1.442695
      %v2460 = vpow.pop %v2459
      %v2461 = vmul.f32 %v2424, 1.442695
      %v2462 = vpow.pop %v2461
      %v2463 = vmul.f32 %v2425, 1.442695
      %v2464 = vpow.pop %v2463
      %v2465 = vmul.f32 %v2426, 1.442695
      %v2466 = vpow.pop %v2465
      %v2467 = vmul.f32 %v2427, 1.442695
      %v2468 = vpow.pop %v2467
      %v2469 = vmul.f32 %v2428, 1.442695
      %v2470 = vpow.pop %v2469
      %v2471 = vmul.f32 %v2429, 1.442695
      %v2472 = vpow.pop %v2471
      %v2473 = vmul.f32 %v2430, 1.442695
      %v2474 = vpow.pop %v2473
      %v2475 = vmul.f32 %v2431, 1.442695
      %v2476 = vpow.pop %v2475
      %v2477 = vmul.f32 %v2432, 1.442695
      %v2478 = vpow.pop %v2477
      %v2479 = vmul.f32 %v2433, 1.442695
      %v2480 = vpow.pop %v2479
      %v2481 = vmul.f32 %v2434, 1.442695
      %v2482 = vpow.pop %v2481
      %v2483 = vmul.f32 %v2435, 1.442695
      %v2484 = vpow.pop %v2483
      %v2485 = vmul.f32 %v2436, 1.442695
      %v2486 = vpow.pop %v2485
      %v2487 = vmul.f32 %v2437, 1.442695
      %v2488 = vpow.pop %v2487
      %v2489 = vmul.f32 %v2438, 1.442695
      %v2490 = vpow.pop %v2489
      %v2491 = vmul.f32 %v2439, 1.442695
      %v2492 = vpow.pop %v2491
      %v2493 = vmul.f32 %v2440, 1.442695
      %v2494 = vpow.pop %v2493
      %v2495 = vmul.f32 %v2441, 1.442695
      %v2496 = vpow.pop %v2495
      %v2497 = vmul.f32 %v2442, 1.442695
      %v2498 = vpow.pop %v2497
      %v2499 = vmul.f32 %v2443, 1.442695
      %v2500 = vpow.pop %v2499
      %v2501 = vmul.f32 %v2444, 1.442695
      %v2502 = vpow.pop %v2501
      %v2503 = vmul.f32 %v2445, 1.442695
      %v2504 = vpow.pop %v2503
      %v2505 = vmul.f32 %v2446, 1.442695
      %v2506 = vpow.pop %v2505
      %v2507 = vmul.f32 %v2447, 1.442695
      %v2508 = vpow.pop %v2507
      %v2509 = vmul.f32 %v2448, 1.442695
      %v2510 = vpow.pop %v2509
      %v2511 = vmul.f32 %v2449, 1.442695
      %v2512 = vpow.pop %v2511
      %v2513 = vmul.f32 %v2450, 1.442695
      %v2514 = vpow.pop %v2513
      %v2515 = vpack.c.bf16 %v2456, %v2452
      %v2516 = vpack.c.bf16 %v2458, %v2454
      %v2517 = vpack.c.bf16 %v2464, %v2460
      %v2518 = vpack.c.bf16 %v2466, %v2462
      %v2519 = vpack.c.bf16 %v2472, %v2468
      %v2520 = vpack.c.bf16 %v2474, %v2470
      %v2521 = vpack.c.bf16 %v2480, %v2476
      %v2522 = vpack.c.bf16 %v2482, %v2478
      %v2523 = vpack.c.bf16 %v2488, %v2484
      %v2524 = vpack.c.bf16 %v2490, %v2486
      %v2525 = vpack.c.bf16 %v2496, %v2492
      %v2526 = vpack.c.bf16 %v2498, %v2494
      %v2527 = vpack.c.bf16 %v2504, %v2500
      %v2528 = vpack.c.bf16 %v2506, %v2502
      %v2529 = vpack.c.bf16 %v2512, %v2508
      %v2530 = vpack.c.bf16 %v2514, %v2510
      %s2531 = scalar_lea.vmem [#allocation3], 24
      %v2532 = vld [vmem:[%s2531] sm:$0xff]
      %v2534 = vunpack.c.l.b16 %v2532
      %v2535 = vunpack.c.h.b16 %v2532
      %v2536 = vpack.c.b16 %v2534, %v2534
      %v2537 = vpack.c.b16 %v2535, %v2535
      %2540 = vmatpush.bf16.xpose.msra.mxu0 %v2529
      %2541 = vmatpush.bf16.xpose.msra.mxu0 %v2527
      %2542 = vmatpush.bf16.xpose.msra.mxu0 %v2525
      %2543 = vmatpush.bf16.xpose.msra.mxu0 %v2523
      %2544 = vmatpush.bf16.xpose.msra.mxu0 %v2521
      %2545 = vmatpush.bf16.xpose.msra.mxu0 %v2519
      %2546 = vmatpush.bf16.xpose.msra.mxu0 %v2517
      %2547 = vmatpush.bf16.xpose.msra.mxu0 %v2515
      %2548 = vmatmul.bf16.gmra.mxu0 %v2536
      %v2549 = vpop.f32.mrf.mxu0
      %v2550 = vadd.f32 0.0, %v2549
      %v2551 = vpop.f32.mrf.mxu0
      %2552 = vdwg.mxu0
      %2553 = vmatpush.bf16.xpose.msra.mxu0 %v2530
      %2554 = vmatpush.bf16.xpose.msra.mxu0 %v2528
      %2555 = vmatpush.bf16.xpose.msra.mxu0 %v2526
      %2556 = vmatpush.bf16.xpose.msra.mxu0 %v2524
      %2557 = vmatpush.bf16.xpose.msra.mxu0 %v2522
      %2558 = vmatpush.bf16.xpose.msra.mxu0 %v2520
      %2559 = vmatpush.bf16.xpose.msra.mxu0 %v2518
      %2560 = vmatpush.bf16.xpose.msra.mxu0 %v2516
      %2561 = vmatmul.bf16.gmra.mxu0 %v2537
      %v2562 = vpop.f32.mrf.mxu0
      %v2563 = vadd.f32 %v2550, %v2562
      %v2564 = vpop.f32.mrf.mxu0
      %2565 = vdwg.mxu0
      %v2566 = vrcp.pop %v2563
      %v2567 = vperm.slane %v2566, 4
      %v2568 = vmul.f32 %v2563, %v2567
      %v2569 = vadd.f32 %v2147, %v2568
      %v2570 = vld [vmem:[%s5] sm:$0xf]
      %2572 = vset.pattern.permute.xlu0 0
      %2573 = vperm.xlu0 %2572, %v2570
      %v2574 = vpop.permute.xlu0 %2573
      %v2576 = vadd.f32 %v2569, %v2574
      %2577 = vst [vmem:[%s302] sm:$0xf] %v2576
      %p2578 = scmp.lt.s32.totalorder %s21, 1
      %s2579 = scalar_select %p2578, %s21, 1
      %p2580 = scmp.lt.s32.totalorder %s22, 1
      %s2581 = scalar_select %p2580, %s22, 1
      %s2582 = smul.addr %s2579, 2
      %s2583 = sadd.s32 %s2581, %s2582
      %s2584 = smul.addr %s2583, 4
      %s2585 = scalar_lea.vmem %s6, %s2584
      // Predicated region
      $region49: #{attention_forward.1} parent=43 // pred_check
        %p2586 = pneg %p187
      $region50: #{attention_forward.1} parent=43 // pred_check_branch
        %2588 = sbr.rel (%p2586) target = $region52
      $region51: #{attention_forward.1} parent=43 // pred_region
        _
      $region52: #{attention_forward.1} parent=43 // pred_fallthru
        _
    $region44: #{attention_forward.1} parent=5 // pred_fallthru
      _
    %p2589 = scmp.le.s32.totalorder 2, %s12
    // Predicated region
    $region53: #{attention_forward.1} parent=5 // pred_check
      %p2590 = pneg %p2589
    $region54: #{attention_forward.1} parent=5 // pred_check_branch
      %2592 = sbr.rel (%p2590) target = $region56
    $region55: #{attention_forward.1} parent=5 // pred_region
      %s2593 = ssub.s32 %s12, 2
      // Predicated region
      $region57: #{attention_forward.1} parent=55 // pred_check
        %p2594 = pneg %p193
      $region58: #{attention_forward.1} parent=55 // pred_check_branch
        %2596 = sbr.rel (%p2594) target = $region60
      $region59: #{attention_forward.1} parent=55 // pred_region
        %p2597 = scmp.lt.s32.totalorder %s23, 1
        %s2598 = scalar_select %p2597, %s23, 1
        %p2599 = scmp.lt.s32.totalorder %s24, 1
        %s2600 = scalar_select %p2599, %s24, 1
        %s2601 = smul.addr %s2598, 2
        %s2602 = sadd.s32 %s2600, %s2601
        %s2603 = smul.addr %s2602, 4
        %s2604 = scalar_lea.vmem %s6, %s2603
      $region60: #{attention_forward.1} parent=55 // pred_fallthru
        _
    $region56: #{attention_forward.1} parent=5 // pred_fallthru
      _
  $region6: #{attention_forward.1} parent=0 // loop_footer
    %s16 = sadd.s32 1, %s12
  $region7: #{attention_forward.1} parent=0 // loop_footer_branch
    %11 = sbr.rel target = $region3
  $region8: #{attention_forward.1} parent=0 // loop_exit
    _

</llo_original>
